<compile_context>
chip_gen: v7x
topology: tpu7x:2x2x1
jax: 0.10.0
libtpu: 0.0.40
codegen_flags: <defaults>
</compile_context>

<pallas_src>
import numpy as np
import jax
import jax.numpy as jnp
from jax.experimental import pallas as pl
from jax.experimental.pallas import tpu as pltpu


# ----------------------------- basis construction -----------------------------

def linspace(backcast_length, forecast_length):
    lin_space = np.linspace(-backcast_length, forecast_length,
                            backcast_length + forecast_length)
    return lin_space[:backcast_length], lin_space[backcast_length:]


def trend_basis(t, p):
    # T = [t**i for i in range(p)] -> [p, len(t)], float32 (matches torch .float())
    return np.stack([t ** i for i in range(p)], axis=0).astype(np.float32)


# ---------------------------------- kernel ------------------------------------

def trend_block_kernel(x_ref, w1_ref, b1_ref, w2_ref, b2_ref, w3_ref, b3_ref,
                       w4_ref, b4_ref, wtrend_ref, out_ref):
    """One batch tile: 4x (Linear+ReLU) then a single fused trend matmul.

    All dots accumulate in f32 (preferred_element_type); x / w1..w4 may be bf16.
    Biases and the fused (theta @ [T_b|T_f]) weight are f32. The fused trend weight
    is zero-padded to a 128-lane multiple so the output store is fully lane-dense.
    """
    cd = w1_ref.dtype
    f32 = jnp.float32
    h = jnp.dot(x_ref[...], w1_ref[...], preferred_element_type=f32)
    h = jnp.maximum(h + b1_ref[...], 0.0).astype(cd)
    h = jnp.dot(h, w2_ref[...], preferred_element_type=f32)
    h = jnp.maximum(h + b2_ref[...], 0.0).astype(cd)
    h = jnp.dot(h, w3_ref[...], preferred_element_type=f32)
    h = jnp.maximum(h + b3_ref[...], 0.0).astype(cd)
    h = jnp.dot(h, w4_ref[...], preferred_element_type=f32)
    h = jnp.maximum(h + b4_ref[...], 0.0).astype(cd)
    out = jnp.dot(h.astype(f32), wtrend_ref[...], preferred_element_type=f32)
    out_ref[...] = out.astype(out_ref.dtype)


# --------------------------------- wrapper -------------------------------------

def _num_tensorcores():
    """Best-effort detection of TensorCores per chip (v7x has 2, v5e/v6e have 1)."""
    try:
        kind = jax.devices()[0].device_kind.lower()
    except Exception:
        return 1
    return 2 if "v7" in kind else 1


def _round_up(x, m):
    return ((int(x) + m - 1) // m) * m


def _pick_block_batch(batch, bytes_per_row, requested=None, num_cores=1,
                      vmem_budget_bytes=16 << 20):
    """Batch-tile rows: one big tile on 1-TC chips, >=2 even 16-aligned tiles on 2-TC."""
    batch = int(batch)
    if requested is not None:
        tb = min(int(requested), batch)
    elif num_cores <= 1 or batch <= 32:
        tb = batch                                   # single grid step
    else:
        tb = _round_up(pl.cdiv(batch, num_cores), 16)  # >=2 programs for megacore
    # Cap against a conservative double-buffered x+out VMEM budget.
    max_rows = max(16, vmem_budget_bytes // max(1, 2 * bytes_per_row))
    tb = min(tb, batch, max_rows)
    if tb < batch:
        tb = max(16, (tb // 16) * 16)                # bf16 sublane-pair aligned
    return tb


def trend_block_forward(x, params, T_b, T_f, *, block_batch=None,
                        compute_dtype=jnp.bfloat16):
    """Fused TrendBlock forward. Returns (backcast, forecast) in float32."""
    B, L_in = x.shape
    L_b = int(T_b.shape[1])
    L_f = int(T_f.shape[1])
    L_out = L_b + L_f
    L_pad = _round_up(L_out, 128)                    # lane-dense output slab width
    units = int(params["w1"].shape[1])

    # Fold theta projection + trend bases into one [units, L_pad] f32 weight.
    w_trend = jnp.dot(params["wt"], jnp.concatenate([T_b, T_f], axis=1),
                      preferred_element_type=jnp.float32)
    w_trend = jnp.zeros((units, L_pad), jnp.float32).at[:, :L_out].set(w_trend)

    cd = compute_dtype
    f32 = jnp.float32
    args = (x.astype(cd),
            params["w1"].astype(cd), params["b1"].astype(f32),
            params["w2"].astype(cd), params["b2"].astype(f32),
            params["w3"].astype(cd), params["b3"].astype(f32),
            params["w4"].astype(cd), params["b4"].astype(f32),
            w_trend)

    bytes_per_row = L_in * jnp.dtype(cd).itemsize + L_pad * 4
    TB = _pick_block_batch(B, bytes_per_row, requested=block_batch,
                           num_cores=_num_tensorcores())
    grid = (pl.cdiv(B, TB),)

    def resident(a):  # whole array stays VMEM-resident across the batch grid
        return pl.BlockSpec(a.shape, lambda i, _nd=a.ndim: (0,) * _nd)

    in_specs = [pl.BlockSpec((TB, L_in), lambda i: (i, 0))]
    in_specs += [resident(a) for a in args[1:]]
    out_specs = pl.BlockSpec((TB, L_pad), lambda i: (i, 0))

    flops = 2 * B * (L_in * units + 3 * units * units + units * L_pad)
    bytes_accessed = sum(int(np.prod(a.shape)) * a.dtype.itemsize for a in args)
    bytes_accessed += B * L_pad * 4   # f32 output slab
    cost = pl.CostEstimate(flops=flops, transcendentals=0,
                           bytes_accessed=bytes_accessed)

    out = pl.pallas_call(
        trend_block_kernel,
        out_shape=jax.ShapeDtypeStruct((B, L_pad), jnp.float32),
        grid_spec=pltpu.PrefetchScalarGridSpec(
            num_scalar_prefetch=0,
            grid=grid,
            in_specs=in_specs,
            out_specs=out_specs),
        compiler_params=pltpu.CompilerParams(
            dimension_semantics=("parallel",)),
        cost_estimate=cost,
    )(*args)

    return out[:, :L_b], out[:, L_b:L_out]


# --------------------------- init & references ---------------------------------

def init_params(key, backcast_length, units, thetas_dim):
    ks = jax.random.split(key, 9)

    def lin(k, fan_in, fan_out):
        bound = 1.0 / np.sqrt(fan_in)   # torch-like U(-1/sqrt(fan_in), +)
        return jax.random.uniform(k, (fan_in, fan_out), jnp.float32, -bound, bound)

    def bias(k, fan_in, fan_out):
        bound = 1.0 / np.sqrt(fan_in)
        return jax.random.uniform(k, (1, fan_out), jnp.float32, -bound, bound)

    return {
        "w1": lin(ks[0], backcast_length, units), "b1": bias(ks[1], backcast_length, units),
        "w2": lin(ks[2], units, units),           "b2": bias(ks[3], units, units),
        "w3": lin(ks[4], units, units),           "b3": bias(ks[5], units, units),
        "w4": lin(ks[6], units, units),           "b4": bias(ks[7], units, units),
        # shared theta_b_fc == theta_f_fc, bias=False
        "wt": lin(ks[8], units, thetas_dim),
    }


def reference_forward(x, params, T_b, T_f):
    """Plain-JAX f32 reference matching the PyTorch module exactly (unfused)."""
    h = jax.nn.relu(x @ params["w1"] + params["b1"])
    h = jax.nn.relu(h @ params["w2"] + params["b2"])
    h = jax.nn.relu(h @ params["w3"] + params["b3"])
    h = jax.nn.relu(h @ params["w4"] + params["b4"])
    thetas = h @ params["wt"]
    return thetas @ T_b, thetas @ T_f


def reference_forward_fused(x, params, T_b, T_f, compute_dtype):
    """Plain-JAX reference mirroring the kernel's numerics (bf16 ops, f32 acc)."""
    cd = compute_dtype
    f32 = jnp.float32
    w_trend = jnp.dot(params["wt"], jnp.concatenate([T_b, T_f], axis=1),
                      preferred_element_type=f32)
    h = x.astype(cd)
    for wk, bk in (("w1", "b1"), ("w2", "b2"), ("w3", "b3"), ("w4", "b4")):
        h = jnp.dot(h, params[wk].astype(cd), preferred_element_type=f32)
        h = jnp.maximum(h + params[bk], 0.0).astype(cd)
    out = jnp.dot(h.astype(f32), w_trend, preferred_element_type=f32)
    L_b = T_b.shape[1]
    return out[:, :L_b], out[:, L_b:]


# ----------------------------------- main ---------------------------------------

if __name__ == "__main__":
    # Small shapes consistent with the module (thetas_dim must be <= 4).
    batch = 256
    backcast_length = 16
    forecast_length = 8
    units = 32
    thetas_dim = 4

    key = jax.random.PRNGKey(0)
    kx, kp = jax.random.split(key)
    x = jax.random.normal(kx, (batch, backcast_length), jnp.float32)
    params = init_params(kp, backcast_length, units, thetas_dim)

    b_ls, f_ls = linspace(backcast_length, forecast_length)
    T_b = jnp.asarray(trend_basis(b_ls, thetas_dim))   # [thetas_dim, L_b]
    T_f = jnp.asarray(trend_basis(f_ls, thetas_dim))   # [thetas_dim, L_f]

    # 1) f32 path, auto tile selection (single big tile on 1-TC chips, >=2 even
    #    tiles on v7x): tight check vs the unfused PyTorch-semantics reference
    #    (basis folding only re-associates f32 sums; pad lanes are zero).
    back32, fore32 = trend_block_forward(x, params, T_b, T_f,
                                         compute_dtype=jnp.float32)
    jax.block_until_ready((back32, fore32))
    ref_b, ref_f = reference_forward(x, params, T_b, T_f)
    np.testing.assert_allclose(np.asarray(back32), np.asarray(ref_b),
                               rtol=1e-3, atol=1e-2)
    np.testing.assert_allclose(np.asarray(fore32), np.asarray(ref_f),
                               rtol=1e-3, atol=1e-2)

    # 1b) f32 path with a forced 2-step grid to exercise the multi-tile /
    #     megacore-style path on any chip.
    back32m, fore32m = trend_block_forward(x, params, T_b, T_f,
                                           block_batch=128,
                                           compute_dtype=jnp.float32)
    jax.block_until_ready((back32m, fore32m))
    np.testing.assert_allclose(np.asarray(back32m), np.asarray(ref_b),
                               rtol=1e-3, atol=1e-2)
    np.testing.assert_allclose(np.asarray(fore32m), np.asarray(ref_f),
                               rtol=1e-3, atol=1e-2)

    # 2) bf16 operand path (the v6e/v7x performance configuration): check vs a
    #    matching bf16-operand / f32-accumulation / f32-trend-weight reference.
    back16, fore16 = trend_block_forward(x, params, T_b, T_f,
                                         compute_dtype=jnp.bfloat16)
    jax.block_until_ready((back16, fore16))
    rb16, rf16 = reference_forward_fused(x, params, T_b, T_f, jnp.bfloat16)
    np.testing.assert_allclose(np.asarray(back16), np.asarray(rb16),
                               rtol=2e-2, atol=2e-2)
    np.testing.assert_allclose(np.asarray(fore16), np.asarray(rf16),
                               rtol=2e-2, atol=2e-2)

    print("KERNEL_OK")
</pallas_src>

<mosaic_0001>
module attributes {stable_mosaic.version = 11 : i64} {
  func.func @trend_block_kernel(%arg0: i32, %arg1: memref<256x16xf32, #tpu.memory_space<vmem>>, %arg2: memref<16x32xf32, #tpu.memory_space<vmem>>, %arg3: memref<1x32xf32, #tpu.memory_space<vmem>>, %arg4: memref<32x32xf32, #tpu.memory_space<vmem>>, %arg5: memref<1x32xf32, #tpu.memory_space<vmem>>, %arg6: memref<32x32xf32, #tpu.memory_space<vmem>>, %arg7: memref<1x32xf32, #tpu.memory_space<vmem>>, %arg8: memref<32x32xf32, #tpu.memory_space<vmem>>, %arg9: memref<1x32xf32, #tpu.memory_space<vmem>>, %arg10: memref<32x128xf32, #tpu.memory_space<vmem>>, %arg11: memref<256x128xf32, #tpu.memory_space<vmem>>) attributes {dimension_semantics = [#tpu.dimension_semantics<parallel>], iteration_bounds = array<i64: 1>, scalar_prefetch = 0 : i64, scratch_operands = 0 : i64, tpu.core_type = #tpu.core_type<tc>, window_params = [{transform_indices = @transform_0, window_bounds = array<i64: 256, 16>}, {pipeline_mode = #tpu.pipeline_mode<synchronous>, transform_indices = @transform_1, window_bounds = array<i64: 16, 32>}, {pipeline_mode = #tpu.pipeline_mode<synchronous>, transform_indices = @transform_2, window_bounds = array<i64: 1, 32>}, {pipeline_mode = #tpu.pipeline_mode<synchronous>, transform_indices = @transform_3, window_bounds = array<i64: 32, 32>}, {pipeline_mode = #tpu.pipeline_mode<synchronous>, transform_indices = @transform_4, window_bounds = array<i64: 1, 32>}, {pipeline_mode = #tpu.pipeline_mode<synchronous>, transform_indices = @transform_5, window_bounds = array<i64: 32, 32>}, {pipeline_mode = #tpu.pipeline_mode<synchronous>, transform_indices = @transform_6, window_bounds = array<i64: 1, 32>}, {pipeline_mode = #tpu.pipeline_mode<synchronous>, transform_indices = @transform_7, window_bounds = array<i64: 32, 32>}, {pipeline_mode = #tpu.pipeline_mode<synchronous>, transform_indices = @transform_8, window_bounds = array<i64: 1, 32>}, {pipeline_mode = #tpu.pipeline_mode<synchronous>, transform_indices = @transform_9, window_bounds = array<i64: 32, 128>}, {transform_indices = @transform_10, window_bounds = array<i64: 256, 128>}]} {
    %c0 = arith.constant 0 : index
    %c0_0 = arith.constant 0 : index
    %0 = vector.load %arg1[%c0, %c0_0] : memref<256x16xf32, #tpu.memory_space<vmem>>, vector<256x16xf32>
    %c0_1 = arith.constant 0 : index
    %c0_2 = arith.constant 0 : index
    %1 = vector.load %arg2[%c0_1, %c0_2] : memref<16x32xf32, #tpu.memory_space<vmem>>, vector<16x32xf32>
    %cst = arith.constant dense<0.000000e+00> : vector<256x32xf32>
    %2 = tpu.matmul %0, %1, %cst {dimension_numbers = #tpu.dot_dimension_numbers<[1], [0], [0], [1], [0, 0, 1, 1], [], []>} : vector<256x16xf32>, vector<16x32xf32>, vector<256x32xf32> -> vector<256x32xf32>
    %c0_3 = arith.constant 0 : index
    %c0_4 = arith.constant 0 : index
    %3 = vector.load %arg3[%c0_3, %c0_4] : memref<1x32xf32, #tpu.memory_space<vmem>>, vector<1x32xf32>
    %4 = vector.broadcast %3 : vector<1x32xf32> to vector<256x32xf32>
    %5 = arith.addf %2, %4 : vector<256x32xf32>
    %cst_5 = arith.constant 0.000000e+00 : f32
    %6 = vector.broadcast %cst_5 : f32 to vector<256x32xf32>
    %7 = arith.maximumf %5, %6 : vector<256x32xf32>
    %c0_6 = arith.constant 0 : index
    %c0_7 = arith.constant 0 : index
    %8 = vector.load %arg4[%c0_6, %c0_7] : memref<32x32xf32, #tpu.memory_space<vmem>>, vector<32x32xf32>
    %cst_8 = arith.constant dense<0.000000e+00> : vector<256x32xf32>
    %9 = tpu.matmul %7, %8, %cst_8 {dimension_numbers = #tpu.dot_dimension_numbers<[1], [0], [0], [1], [0, 0, 1, 1], [], []>} : vector<256x32xf32>, vector<32x32xf32>, vector<256x32xf32> -> vector<256x32xf32>
    %c0_9 = arith.constant 0 : index
    %c0_10 = arith.constant 0 : index
    %10 = vector.load %arg5[%c0_9, %c0_10] : memref<1x32xf32, #tpu.memory_space<vmem>>, vector<1x32xf32>
    %11 = vector.broadcast %10 : vector<1x32xf32> to vector<256x32xf32>
    %12 = arith.addf %9, %11 : vector<256x32xf32>
    %cst_11 = arith.constant 0.000000e+00 : f32
    %13 = vector.broadcast %cst_11 : f32 to vector<256x32xf32>
    %14 = arith.maximumf %12, %13 : vector<256x32xf32>
    %c0_12 = arith.constant 0 : index
    %c0_13 = arith.constant 0 : index
    %15 = vector.load %arg6[%c0_12, %c0_13] : memref<32x32xf32, #tpu.memory_space<vmem>>, vector<32x32xf32>
    %cst_14 = arith.constant dense<0.000000e+00> : vector<256x32xf32>
    %16 = tpu.matmul %14, %15, %cst_14 {dimension_numbers = #tpu.dot_dimension_numbers<[1], [0], [0], [1], [0, 0, 1, 1], [], []>} : vector<256x32xf32>, vector<32x32xf32>, vector<256x32xf32> -> vector<256x32xf32>
    %c0_15 = arith.constant 0 : index
    %c0_16 = arith.constant 0 : index
    %17 = vector.load %arg7[%c0_15, %c0_16] : memref<1x32xf32, #tpu.memory_space<vmem>>, vector<1x32xf32>
    %18 = vector.broadcast %17 : vector<1x32xf32> to vector<256x32xf32>
    %19 = arith.addf %16, %18 : vector<256x32xf32>
    %cst_17 = arith.constant 0.000000e+00 : f32
    %20 = vector.broadcast %cst_17 : f32 to vector<256x32xf32>
    %21 = arith.maximumf %19, %20 : vector<256x32xf32>
    %c0_18 = arith.constant 0 : index
    %c0_19 = arith.constant 0 : index
    %22 = vector.load %arg8[%c0_18, %c0_19] : memref<32x32xf32, #tpu.memory_space<vmem>>, vector<32x32xf32>
    %cst_20 = arith.constant dense<0.000000e+00> : vector<256x32xf32>
    %23 = tpu.matmul %21, %22, %cst_20 {dimension_numbers = #tpu.dot_dimension_numbers<[1], [0], [0], [1], [0, 0, 1, 1], [], []>} : vector<256x32xf32>, vector<32x32xf32>, vector<256x32xf32> -> vector<256x32xf32>
    %c0_21 = arith.constant 0 : index
    %c0_22 = arith.constant 0 : index
    %24 = vector.load %arg9[%c0_21, %c0_22] : memref<1x32xf32, #tpu.memory_space<vmem>>, vector<1x32xf32>
    %25 = vector.broadcast %24 : vector<1x32xf32> to vector<256x32xf32>
    %26 = arith.addf %23, %25 : vector<256x32xf32>
    %cst_23 = arith.constant 0.000000e+00 : f32
    %27 = vector.broadcast %cst_23 : f32 to vector<256x32xf32>
    %28 = arith.maximumf %26, %27 : vector<256x32xf32>
    %c0_24 = arith.constant 0 : index
    %c0_25 = arith.constant 0 : index
    %29 = vector.load %arg10[%c0_24, %c0_25] : memref<32x128xf32, #tpu.memory_space<vmem>>, vector<32x128xf32>
    %cst_26 = arith.constant dense<0.000000e+00> : vector<256x128xf32>
    %30 = tpu.matmul %28, %29, %cst_26 {dimension_numbers = #tpu.dot_dimension_numbers<[1], [0], [0], [1], [0, 0, 1, 1], [], []>} : vector<256x32xf32>, vector<32x128xf32>, vector<256x128xf32> -> vector<256x128xf32>
    %c0_27 = arith.constant 0 : index
    %c0_28 = arith.constant 0 : index
    %31 = vector.load %arg11[%c0_27, %c0_28] : memref<256x128xf32, #tpu.memory_space<vmem>>, vector<256x128xf32>
    tpu.vector_store %arg11[%c0_27, %c0_28], %30 {strides = array<i32>} : memref<256x128xf32, #tpu.memory_space<vmem>>, vector<256x128xf32>,
    return
  }
  func.func @transform_0(%arg0: i32) -> (i32, i32) {
    %c0_i32 = arith.constant 0 : i32
    %c0_i32_0 = arith.constant 0 : i32
    return %arg0, %c0_i32 : i32, i32
  }
  func.func @transform_1(%arg0: i32) -> (i32, i32) {
    %c0_i32 = arith.constant 0 : i32
    %c0_i32_0 = arith.constant 0 : i32
    %c0_i32_1 = arith.constant 0 : i32
    return %c0_i32, %c0_i32_0 : i32, i32
  }
  func.func @transform_2(%arg0: i32) -> (i32, i32) {
    %c0_i32 = arith.constant 0 : i32
    %c0_i32_0 = arith.constant 0 : i32
    %c0_i32_1 = arith.constant 0 : i32
    return %c0_i32, %c0_i32_0 : i32, i32
  }
  func.func @transform_3(%arg0: i32) -> (i32, i32) {
    %c0_i32 = arith.constant 0 : i32
    %c0_i32_0 = arith.constant 0 : i32
    %c0_i32_1 = arith.constant 0 : i32
    return %c0_i32, %c0_i32_0 : i32, i32
  }
  func.func @transform_4(%arg0: i32) -> (i32, i32) {
    %c0_i32 = arith.constant 0 : i32
    %c0_i32_0 = arith.constant 0 : i32
    %c0_i32_1 = arith.constant 0 : i32
    return %c0_i32, %c0_i32_0 : i32, i32
  }
  func.func @transform_5(%arg0: i32) -> (i32, i32) {
    %c0_i32 = arith.constant 0 : i32
    %c0_i32_0 = arith.constant 0 : i32
    %c0_i32_1 = arith.constant 0 : i32
    return %c0_i32, %c0_i32_0 : i32, i32
  }
  func.func @transform_6(%arg0: i32) -> (i32, i32) {
    %c0_i32 = arith.constant 0 : i32
    %c0_i32_0 = arith.constant 0 : i32
    %c0_i32_1 = arith.constant 0 : i32
    return %c0_i32, %c0_i32_0 : i32, i32
  }
  func.func @transform_7(%arg0: i32) -> (i32, i32) {
    %c0_i32 = arith.constant 0 : i32
    %c0_i32_0 = arith.constant 0 : i32
    %c0_i32_1 = arith.constant 0 : i32
    return %c0_i32, %c0_i32_0 : i32, i32
  }
  func.func @transform_8(%arg0: i32) -> (i32, i32) {
    %c0_i32 = arith.constant 0 : i32
    %c0_i32_0 = arith.constant 0 : i32
    %c0_i32_1 = arith.constant 0 : i32
    return %c0_i32, %c0_i32_0 : i32, i32
  }
  func.func @transform_9(%arg0: i32) -> (i32, i32) {
    %c0_i32 = arith.constant 0 : i32
    %c0_i32_0 = arith.constant 0 : i32
    %c0_i32_1 = arith.constant 0 : i32
    return %c0_i32, %c0_i32_0 : i32, i32
  }
  func.func @transform_10(%arg0: i32) -> (i32, i32) {
    %c0_i32 = arith.constant 0 : i32
    %c0_i32_0 = arith.constant 0 : i32
    return %arg0, %c0_i32 : i32, i32
  }
}

</mosaic_0001>

<llo_original>
// kernel: tpu_custom_call.1
$region0: #{tpu_custom_call.1}
  #allocation0 [shape = 'u32[]', space=smem, size = 0x4, offset = 0x4, fixed_abs, tag = 'smem constant byte address 0x4 - core index']
  #allocation1 [shape = 'u32[144,128]{1,0:T(1,128)}', space=vmem, size = 0x12000, scoped, tag = 'internal scratch']
  %s0 = inlined_call_operand.vmem [shape: f32[256,16], index: 0, kind: input, shape index: {}]
  %s1 = inlined_call_operand.vmem [shape: f32[16,32], index: 1, kind: input, shape index: {}]
  %s2 = inlined_call_operand.vmem [shape: f32[1,32], index: 2, kind: input, shape index: {}]
  %s3 = inlined_call_operand.vmem [shape: f32[32,32], index: 3, kind: input, shape index: {}]
  %s4 = inlined_call_operand.vmem [shape: f32[1,32], index: 4, kind: input, shape index: {}]
  %s5 = inlined_call_operand.vmem [shape: f32[32,32], index: 5, kind: input, shape index: {}]
  %s6 = inlined_call_operand.vmem [shape: f32[1,32], index: 6, kind: input, shape index: {}]
  %s7 = inlined_call_operand.vmem [shape: f32[32,32], index: 7, kind: input, shape index: {}]
  %s8 = inlined_call_operand.vmem [shape: f32[1,32], index: 8, kind: input, shape index: {}]
  %s9 = inlined_call_operand.vmem [shape: f32[32,128], index: 9, kind: input, shape index: {}]
  %s10 = inlined_call_operand.hbm [shape: f32[256,128], index: 10, kind: output, shape index: {}]
  %s11 = sld [smem:[#allocation0]]
  $region50: #{tpu_custom_call.1} parent=0
    _
  %s13 = ssub.s32 1, %s11
  %s14 = scalar_select 0, %s13, %s11
  $region1: #{tpu_custom_call.1} parent=0
    #allocation2 [shape = 'u8[131072]{0}', space=vmem, size = 0x20000, scoped, tag = 'output window, operand 0, single buffered']
    #allocation3 [shape = 's32[1]{0}', space=sflag, size = 0x4, scoped, tag = 'scoped memory for tpu_custom_call.1']
    %15 = vsyncpa [#allocation3], 0
    // Predicated region
    $region2: #{tpu_custom_call.1} parent=1 // pred_check
      _
    $region3: #{tpu_custom_call.1} parent=1 // pred_check_branch
      %17 = sbr.rel (0) target = $region5
    $region4: #{tpu_custom_call.1} parent=1 // pred_region
      _
    $region5: #{tpu_custom_call.1} parent=1 // pred_fallthru
      _
    // Predicated region
    $region6: #{tpu_custom_call.1} parent=1 // pred_check
      _
    $region7: #{tpu_custom_call.1} parent=1 // pred_check_branch
      %19 = sbr.rel (0) target = $region9
    $region8: #{tpu_custom_call.1} parent=1 // pred_region
      _
    $region9: #{tpu_custom_call.1} parent=1 // pred_fallthru
      _
    // Predicated region
    $region10: #{tpu_custom_call.1} parent=1 // pred_check
      _
    $region11: #{tpu_custom_call.1} parent=1 // pred_check_branch
      %21 = sbr.rel (0) target = $region13
    $region12: #{tpu_custom_call.1} parent=1 // pred_region
      _
    $region13: #{tpu_custom_call.1} parent=1 // pred_fallthru
      _
    // Predicated region
    $region14: #{tpu_custom_call.1} parent=1 // pred_check
      _
    $region15: #{tpu_custom_call.1} parent=1 // pred_check_branch
      %23 = sbr.rel (0) target = $region17
    $region16: #{tpu_custom_call.1} parent=1 // pred_region
      _
    $region17: #{tpu_custom_call.1} parent=1 // pred_fallthru
      _
    // Predicated region
    $region18: #{tpu_custom_call.1} parent=1 // pred_check
      _
    $region19: #{tpu_custom_call.1} parent=1 // pred_check_branch
      %25 = sbr.rel (0) target = $region21
    $region20: #{tpu_custom_call.1} parent=1 // pred_region
      _
    $region21: #{tpu_custom_call.1} parent=1 // pred_fallthru
      _
    // Predicated region
    $region22: #{tpu_custom_call.1} parent=1 // pred_check
      _
    $region23: #{tpu_custom_call.1} parent=1 // pred_check_branch
      %27 = sbr.rel (0) target = $region25
    $region24: #{tpu_custom_call.1} parent=1 // pred_region
      _
    $region25: #{tpu_custom_call.1} parent=1 // pred_fallthru
      _
    // Predicated region
    $region26: #{tpu_custom_call.1} parent=1 // pred_check
      _
    $region27: #{tpu_custom_call.1} parent=1 // pred_check_branch
      %29 = sbr.rel (0) target = $region29
    $region28: #{tpu_custom_call.1} parent=1 // pred_region
      _
    $region29: #{tpu_custom_call.1} parent=1 // pred_fallthru
      _
    // Predicated region
    $region30: #{tpu_custom_call.1} parent=1 // pred_check
      _
    $region31: #{tpu_custom_call.1} parent=1 // pred_check_branch
      %31 = sbr.rel (0) target = $region33
    $region32: #{tpu_custom_call.1} parent=1 // pred_region
      _
    $region33: #{tpu_custom_call.1} parent=1 // pred_fallthru
      _
    // Predicated region
    $region34: #{tpu_custom_call.1} parent=1 // pred_check
      _
    $region35: #{tpu_custom_call.1} parent=1 // pred_check_branch
      %33 = sbr.rel (0) target = $region37
    $region36: #{tpu_custom_call.1} parent=1 // pred_region
      _
    $region37: #{tpu_custom_call.1} parent=1 // pred_fallthru
      _
    // Predicated region
    $region38: #{tpu_custom_call.1} parent=1 // pred_check
      _
    $region39: #{tpu_custom_call.1} parent=1 // pred_check_branch
      %35 = sbr.rel (0) target = $region41
    $region40: #{tpu_custom_call.1} parent=1 // pred_region
      _
    $region41: #{tpu_custom_call.1} parent=1 // pred_fallthru
      _
    %v36 = vld [vmem:[%s0] sm:$0xff]
    %v37 = vld [vmem:[%s0 + $0x8] sm:$0xff]
    %v38 = vld [vmem:[%s0 + $0x10] sm:$0xff]
    %v39 = vld [vmem:[%s0 + $0x18] sm:$0xff]
    %v40 = vld [vmem:[%s0 + $0x20] sm:$0xff]
    %v41 = vld [vmem:[%s0 + $0x28] sm:$0xff]
    %v42 = vld [vmem:[%s0 + $0x30] sm:$0xff]
    %v43 = vld [vmem:[%s0 + $0x38] sm:$0xff]
    %v44 = vld [vmem:[%s0 + $0x40] sm:$0xff]
    %v45 = vld [vmem:[%s0 + $0x48] sm:$0xff]
    %v46 = vld [vmem:[%s0 + $0x50] sm:$0xff]
    %v47 = vld [vmem:[%s0 + $0x58] sm:$0xff]
    %v48 = vld [vmem:[%s0 + $0x60] sm:$0xff]
    %v49 = vld [vmem:[%s0 + $0x68] sm:$0xff]
    %v50 = vld [vmem:[%s0 + $0x70] sm:$0xff]
    %v51 = vld [vmem:[%s0 + $0x78] sm:$0xff]
    %v52 = vld [vmem:[%s0 + $0x80] sm:$0xff]
    %v53 = vld [vmem:[%s0 + $0x88] sm:$0xff]
    %v54 = vld [vmem:[%s0 + $0x90] sm:$0xff]
    %v55 = vld [vmem:[%s0 + $0x98] sm:$0xff]
    %v56 = vld [vmem:[%s0 + $0xa0] sm:$0xff]
    %v57 = vld [vmem:[%s0 + $0xa8] sm:$0xff]
    %v58 = vld [vmem:[%s0 + $0xb0] sm:$0xff]
    %v59 = vld [vmem:[%s0 + $0xb8] sm:$0xff]
    %v60 = vld [vmem:[%s0 + $0xc0] sm:$0xff]
    %v61 = vld [vmem:[%s0 + $0xc8] sm:$0xff]
    %v62 = vld [vmem:[%s0 + $0xd0] sm:$0xff]
    %v63 = vld [vmem:[%s0 + $0xd8] sm:$0xff]
    %v64 = vld [vmem:[%s0 + $0xe0] sm:$0xff]
    %v65 = vld [vmem:[%s0 + $0xe8] sm:$0xff]
    %v66 = vld [vmem:[%s0 + $0xf0] sm:$0xff]
    %v67 = vld [vmem:[%s0 + $0xf8] sm:$0xff]
    %v68 = vld [vmem:[%s1] sm:$0xff]
    %v69 = vld [vmem:[%s1 + $0x8] sm:$0xff]
    %v70 = vld [vmem:[%s2] sm:$0x1]
    %v72 = vlaneseq
    %v73 = vshrl.u32 %v72, 7
    %v74 = vsub.s32 0, %v73
    %v75 = vrot.slane %v70, %v74
    %vm77 = vcmask 130048
    %v79 = vsel %vm77, %v36, 0
    %v82 = vsel %vm77, %v37, 0
    %v85 = vsel %vm77, %v38, 0
    %v88 = vsel %vm77, %v39, 0
    %v91 = vsel %vm77, %v40, 0
    %v94 = vsel %vm77, %v41, 0
    %v97 = vsel %vm77, %v42, 0
    %v100 = vsel %vm77, %v43, 0
    %v103 = vsel %vm77, %v44, 0
    %v106 = vsel %vm77, %v45, 0
    %v109 = vsel %vm77, %v46, 0
    %v112 = vsel %vm77, %v47, 0
    %v115 = vsel %vm77, %v48, 0
    %v118 = vsel %vm77, %v49, 0
    %v121 = vsel %vm77, %v50, 0
    %v124 = vsel %vm77, %v51, 0
    %v127 = vsel %vm77, %v52, 0
    %v130 = vsel %vm77, %v53, 0
    %v133 = vsel %vm77, %v54, 0
    %v136 = vsel %vm77, %v55, 0
    %v139 = vsel %vm77, %v56, 0
    %v142 = vsel %vm77, %v57, 0
    %v145 = vsel %vm77, %v58, 0
    %v148 = vsel %vm77, %v59, 0
    %v151 = vsel %vm77, %v60, 0
    %v154 = vsel %vm77, %v61, 0
    %v157 = vsel %vm77, %v62, 0
    %v160 = vsel %vm77, %v63, 0
    %v163 = vsel %vm77, %v64, 0
    %v166 = vsel %vm77, %v65, 0
    %v169 = vsel %vm77, %v66, 0
    %v172 = vsel %vm77, %v67, 0
    %174 = vmatprep.subr.mxu0 0.0
    %175 = vmatpush1.msra.mxu0 %v68
    %176 = vmatprep.subr.mxu0 0.0
    %177 = vmatpush1.msra.mxu0 %v69
    %178 = vmatprep.subr.mxu0 0.0
    %179 = vmatpush1.msra.mxu0 0.0
    %180 = vmatprep.subr.mxu0 0.0
    %181 = vmatpush1.msra.mxu0 0.0
    %182 = vmatprep.subr.mxu0 0.0
    %183 = vmatpush1.msra.mxu0 0.0
    %184 = vmatprep.subr.mxu0 0.0
    %185 = vmatpush1.msra.mxu0 0.0
    %186 = vmatprep.subr.mxu0 0.0
    %187 = vmatpush1.msra.mxu0 0.0
    %188 = vmatprep.subr.mxu0 0.0
    %189 = vmatpush1.msra.mxu0 0.0
    %190 = vmatprep.subr.mxu0 0.0
    %191 = vmatpush1.msra.mxu0 0.0
    %192 = vmatprep.subr.mxu0 0.0
    %193 = vmatpush1.msra.mxu0 0.0
    %194 = vmatprep.subr.mxu0 0.0
    %195 = vmatpush1.msra.mxu0 0.0
    %196 = vmatprep.subr.mxu0 0.0
    %197 = vmatpush1.msra.mxu0 0.0
    %198 = vmatprep.subr.mxu0 0.0
    %199 = vmatpush1.msra.mxu0 0.0
    %200 = vmatprep.subr.mxu0 0.0
    %201 = vmatpush1.msra.mxu0 0.0
    %202 = vmatprep.subr.mxu0 0.0
    %203 = vmatpush1.msra.mxu0 0.0
    %204 = vmatprep.subr.mxu0 0.0
    %205 = vmatpush1.msra.mxu0 0.0
    %206 = vmatprep.subr.mxu0 0.0
    %207 = vmatpush1.msra.mxu0 0.0
    %208 = vmatprep.subr.mxu0 0.0
    %209 = vmatpush1.msra.mxu0 0.0
    %210 = vmatprep.subr.mxu0 0.0
    %211 = vmatpush1.msra.mxu0 0.0
    %212 = vmatprep.subr.mxu0 0.0
    %213 = vmatpush1.msra.mxu0 0.0
    %214 = vmatprep.subr.mxu0 0.0
    %215 = vmatpush1.msra.mxu0 0.0
    %216 = vmatprep.subr.mxu0 0.0
    %217 = vmatpush1.msra.mxu0 0.0
    %218 = vmatprep.subr.mxu0 0.0
    %219 = vmatpush1.msra.mxu0 0.0
    %220 = vmatprep.subr.mxu0 0.0
    %221 = vmatpush1.msra.mxu0 0.0
    %222 = vmatprep.subr.mxu0 0.0
    %223 = vmatpush1.msra.mxu0 0.0
    %224 = vmatprep.subr.mxu0 0.0
    %225 = vmatpush1.msra.mxu0 0.0
    %226 = vmatprep.subr.mxu0 0.0
    %227 = vmatpush1.msra.mxu0 0.0
    %228 = vmatprep.subr.mxu0 0.0
    %229 = vmatpush1.msra.mxu0 0.0
    %230 = vmatprep.subr.mxu0 0.0
    %231 = vmatpush1.msra.mxu0 0.0
    %232 = vmatprep.subr.mxu0 0.0
    %233 = vmatpush1.msra.mxu0 0.0
    %234 = vmatprep.subr.mxu0 0.0
    %235 = vmatpush1.msra.mxu0 0.0
    %236 = vmatprep.subr.mxu0 0.0
    %237 = vmatpush1.msra.mxu0 0.0
    %238 = vmatprep.mubr.f32.mxu0 0.0
    %239 = vmatmul.mubr.f32.gmra.mrb[0].mxu0 %v79
    %v240 = vpop.f32.mrb[0].mxu0
    %v241 = vadd.f32 %v75, %v240
    %v242 = vpop.f32.mrb[0].mxu0
    %243 = vmatprep.mubr.f32.mxu0 0.0
    %244 = vmatmul.mubr.f32.gmra.mrb[0].mxu0 %v82
    %v245 = vpop.f32.mrb[0].mxu0
    %v246 = vadd.f32 %v75, %v245
    %v247 = vpop.f32.mrb[0].mxu0
    %248 = vmatprep.mubr.f32.mxu0 0.0
    %249 = vmatmul.mubr.f32.gmra.mrb[0].mxu0 %v85
    %v250 = vpop.f32.mrb[0].mxu0
    %v251 = vadd.f32 %v75, %v250
    %v252 = vpop.f32.mrb[0].mxu0
    %253 = vmatprep.mubr.f32.mxu0 0.0
    %254 = vmatmul.mubr.f32.gmra.mrb[0].mxu0 %v88
    %v255 = vpop.f32.mrb[0].mxu0
    %v256 = vadd.f32 %v75, %v255
    %v257 = vpop.f32.mrb[0].mxu0
    %258 = vmatprep.mubr.f32.mxu0 0.0
    %259 = vmatmul.mubr.f32.gmra.mrb[0].mxu0 %v91
    %v260 = vpop.f32.mrb[0].mxu0
    %v261 = vadd.f32 %v75, %v260
    %v262 = vpop.f32.mrb[0].mxu0
    %263 = vmatprep.mubr.f32.mxu0 0.0
    %264 = vmatmul.mubr.f32.gmra.mrb[0].mxu0 %v94
    %v265 = vpop.f32.mrb[0].mxu0
    %v266 = vadd.f32 %v75, %v265
    %v267 = vpop.f32.mrb[0].mxu0
    %268 = vmatprep.mubr.f32.mxu0 0.0
    %269 = vmatmul.mubr.f32.gmra.mrb[0].mxu0 %v97
    %v270 = vpop.f32.mrb[0].mxu0
    %v271 = vadd.f32 %v75, %v270
    %v272 = vpop.f32.mrb[0].mxu0
    %273 = vmatprep.mubr.f32.mxu0 0.0
    %274 = vmatmul.mubr.f32.gmra.mrb[0].mxu0 %v100
    %v275 = vpop.f32.mrb[0].mxu0
    %v276 = vadd.f32 %v75, %v275
    %v277 = vpop.f32.mrb[0].mxu0
    %278 = vmatprep.mubr.f32.mxu0 0.0
    %279 = vmatmul.mubr.f32.gmra.mrb[0].mxu0 %v103
    %v280 = vpop.f32.mrb[0].mxu0
    %v281 = vadd.f32 %v75, %v280
    %v282 = vpop.f32.mrb[0].mxu0
    %283 = vmatprep.mubr.f32.mxu0 0.0
    %284 = vmatmul.mubr.f32.gmra.mrb[0].mxu0 %v106
    %v285 = vpop.f32.mrb[0].mxu0
    %v286 = vadd.f32 %v75, %v285
    %v287 = vpop.f32.mrb[0].mxu0
    %288 = vmatprep.mubr.f32.mxu0 0.0
    %289 = vmatmul.mubr.f32.gmra.mrb[0].mxu0 %v109
    %v290 = vpop.f32.mrb[0].mxu0
    %v291 = vadd.f32 %v75, %v290
    %v292 = vpop.f32.mrb[0].mxu0
    %293 = vmatprep.mubr.f32.mxu0 0.0
    %294 = vmatmul.mubr.f32.gmra.mrb[0].mxu0 %v112
    %v295 = vpop.f32.mrb[0].mxu0
    %v296 = vadd.f32 %v75, %v295
    %v297 = vpop.f32.mrb[0].mxu0
    %298 = vmatprep.mubr.f32.mxu0 0.0
    %299 = vmatmul.mubr.f32.gmra.mrb[0].mxu0 %v115
    %v300 = vpop.f32.mrb[0].mxu0
    %v301 = vadd.f32 %v75, %v300
    %v302 = vpop.f32.mrb[0].mxu0
    %303 = vmatprep.mubr.f32.mxu0 0.0
    %304 = vmatmul.mubr.f32.gmra.mrb[0].mxu0 %v118
    %v305 = vpop.f32.mrb[0].mxu0
    %v306 = vadd.f32 %v75, %v305
    %v307 = vpop.f32.mrb[0].mxu0
    %308 = vmatprep.mubr.f32.mxu0 0.0
    %309 = vmatmul.mubr.f32.gmra.mrb[0].mxu0 %v121
    %v310 = vpop.f32.mrb[0].mxu0
    %v311 = vadd.f32 %v75, %v310
    %v312 = vpop.f32.mrb[0].mxu0
    %313 = vmatprep.mubr.f32.mxu0 0.0
    %314 = vmatmul.mubr.f32.gmra.mrb[0].mxu0 %v124
    %v315 = vpop.f32.mrb[0].mxu0
    %v316 = vadd.f32 %v75, %v315
    %v317 = vpop.f32.mrb[0].mxu0
    %318 = vmatprep.mubr.f32.mxu0 0.0
    %319 = vmatmul.mubr.f32.gmra.mrb[0].mxu0 %v127
    %v320 = vpop.f32.mrb[0].mxu0
    %v321 = vadd.f32 %v75, %v320
    %v322 = vpop.f32.mrb[0].mxu0
    %323 = vmatprep.mubr.f32.mxu0 0.0
    %324 = vmatmul.mubr.f32.gmra.mrb[0].mxu0 %v130
    %v325 = vpop.f32.mrb[0].mxu0
    %v326 = vadd.f32 %v75, %v325
    %v327 = vpop.f32.mrb[0].mxu0
    %328 = vmatprep.mubr.f32.mxu0 0.0
    %329 = vmatmul.mubr.f32.gmra.mrb[0].mxu0 %v133
    %v330 = vpop.f32.mrb[0].mxu0
    %v331 = vadd.f32 %v75, %v330
    %v332 = vpop.f32.mrb[0].mxu0
    %333 = vmatprep.mubr.f32.mxu0 0.0
    %334 = vmatmul.mubr.f32.gmra.mrb[0].mxu0 %v136
    %v335 = vpop.f32.mrb[0].mxu0
    %v336 = vadd.f32 %v75, %v335
    %v337 = vpop.f32.mrb[0].mxu0
    %338 = vmatprep.mubr.f32.mxu0 0.0
    %339 = vmatmul.mubr.f32.gmra.mrb[0].mxu0 %v139
    %v340 = vpop.f32.mrb[0].mxu0
    %v341 = vadd.f32 %v75, %v340
    %v342 = vpop.f32.mrb[0].mxu0
    %343 = vmatprep.mubr.f32.mxu0 0.0
    %344 = vmatmul.mubr.f32.gmra.mrb[0].mxu0 %v142
    %v345 = vpop.f32.mrb[0].mxu0
    %v346 = vadd.f32 %v75, %v345
    %v347 = vpop.f32.mrb[0].mxu0
    %348 = vmatprep.mubr.f32.mxu0 0.0
    %349 = vmatmul.mubr.f32.gmra.mrb[0].mxu0 %v145
    %v350 = vpop.f32.mrb[0].mxu0
    %v351 = vadd.f32 %v75, %v350
    %v352 = vpop.f32.mrb[0].mxu0
    %353 = vmatprep.mubr.f32.mxu0 0.0
    %354 = vmatmul.mubr.f32.gmra.mrb[0].mxu0 %v148
    %v355 = vpop.f32.mrb[0].mxu0
    %v356 = vadd.f32 %v75, %v355
    %v357 = vpop.f32.mrb[0].mxu0
    %358 = vmatprep.mubr.f32.mxu0 0.0
    %359 = vmatmul.mubr.f32.gmra.mrb[0].mxu0 %v151
    %v360 = vpop.f32.mrb[0].mxu0
    %v361 = vadd.f32 %v75, %v360
    %v362 = vpop.f32.mrb[0].mxu0
    %363 = vmatprep.mubr.f32.mxu0 0.0
    %364 = vmatmul.mubr.f32.gmra.mrb[0].mxu0 %v154
    %v365 = vpop.f32.mrb[0].mxu0
    %v366 = vadd.f32 %v75, %v365
    %v367 = vpop.f32.mrb[0].mxu0
    %368 = vmatprep.mubr.f32.mxu0 0.0
    %369 = vmatmul.mubr.f32.gmra.mrb[0].mxu0 %v157
    %v370 = vpop.f32.mrb[0].mxu0
    %v371 = vadd.f32 %v75, %v370
    %v372 = vpop.f32.mrb[0].mxu0
    %373 = vmatprep.mubr.f32.mxu0 0.0
    %374 = vmatmul.mubr.f32.gmra.mrb[0].mxu0 %v160
    %v375 = vpop.f32.mrb[0].mxu0
    %v376 = vadd.f32 %v75, %v375
    %v377 = vpop.f32.mrb[0].mxu0
    %378 = vmatprep.mubr.f32.mxu0 0.0
    %379 = vmatmul.mubr.f32.gmra.mrb[0].mxu0 %v163
    %v380 = vpop.f32.mrb[0].mxu0
    %v381 = vadd.f32 %v75, %v380
    %v382 = vpop.f32.mrb[0].mxu0
    %383 = vmatprep.mubr.f32.mxu0 0.0
    %384 = vmatmul.mubr.f32.gmra.mrb[0].mxu0 %v166
    %v385 = vpop.f32.mrb[0].mxu0
    %v386 = vadd.f32 %v75, %v385
    %v387 = vpop.f32.mrb[0].mxu0
    %388 = vmatprep.mubr.f32.mxu0 0.0
    %389 = vmatmul.mubr.f32.gmra.mrb[0].mxu0 %v169
    %v390 = vpop.f32.mrb[0].mxu0
    %v391 = vadd.f32 %v75, %v390
    %v392 = vpop.f32.mrb[0].mxu0
    %393 = vmatprep.mubr.f32.mxu0 0.0
    %394 = vmatmul.mubr.f32.gmra.mrb[0].mxu0 %v172
    %v395 = vpop.f32.mrb[0].mxu0
    %v396 = vadd.f32 %v75, %v395
    %v397 = vpop.f32.mrb[0].mxu0
    %398 = vdwg.mxu0
    %v399 = vmax.f32 %v241, 0.0
    %v400 = vmax.f32 %v246, 0.0
    %v401 = vmax.f32 %v251, 0.0
    %v402 = vmax.f32 %v256, 0.0
    %v403 = vmax.f32 %v261, 0.0
    %v404 = vmax.f32 %v266, 0.0
    %v405 = vmax.f32 %v271, 0.0
    %v406 = vmax.f32 %v276, 0.0
    %v407 = vmax.f32 %v281, 0.0
    %v408 = vmax.f32 %v286, 0.0
    %v409 = vmax.f32 %v291, 0.0
    %v410 = vmax.f32 %v296, 0.0
    %v411 = vmax.f32 %v301, 0.0
    %v412 = vmax.f32 %v306, 0.0
    %v413 = vmax.f32 %v311, 0.0
    %v414 = vmax.f32 %v316, 0.0
    %v415 = vmax.f32 %v321, 0.0
    %v416 = vmax.f32 %v326, 0.0
    %v417 = vmax.f32 %v331, 0.0
    %v418 = vmax.f32 %v336, 0.0
    %v419 = vmax.f32 %v341, 0.0
    %v420 = vmax.f32 %v346, 0.0
    %v421 = vmax.f32 %v351, 0.0
    %v422 = vmax.f32 %v356, 0.0
    %v423 = vmax.f32 %v361, 0.0
    %v424 = vmax.f32 %v366, 0.0
    %v425 = vmax.f32 %v371, 0.0
    %v426 = vmax.f32 %v376, 0.0
    %v427 = vmax.f32 %v381, 0.0
    %v428 = vmax.f32 %v386, 0.0
    %v429 = vmax.f32 %v391, 0.0
    %v430 = vmax.f32 %v396, 0.0
    %v431 = vld [vmem:[%s3] sm:$0xff]
    %v432 = vld [vmem:[%s3 + $0x8] sm:$0xff]
    %v433 = vld [vmem:[%s3 + $0x10] sm:$0xff]
    %v434 = vld [vmem:[%s3 + $0x18] sm:$0xff]
    %v435 = vld [vmem:[%s4] sm:$0x1]
    %v437 = vlaneseq
    %v438 = vshrl.u32 %v437, 7
    %v439 = vsub.s32 0, %v438
    %v440 = vrot.slane %v435, %v439
    %vm442 = vcmask 261120
    %v444 = vsel %vm442, %v399, 0
    %v447 = vsel %vm442, %v400, 0
    %v450 = vsel %vm442, %v401, 0
    %v453 = vsel %vm442, %v402, 0
    %v456 = vsel %vm442, %v403, 0
    %v459 = vsel %vm442, %v404, 0
    %v462 = vsel %vm442, %v405, 0
    %v465 = vsel %vm442, %v406, 0
    %v468 = vsel %vm442, %v407, 0
    %v471 = vsel %vm442, %v408, 0
    %v474 = vsel %vm442, %v409, 0
    %v477 = vsel %vm442, %v410, 0
    %v480 = vsel %vm442, %v411, 0
    %v483 = vsel %vm442, %v412, 0
    %v486 = vsel %vm442, %v413, 0
    %v489 = vsel %vm442, %v414, 0
    %v492 = vsel %vm442, %v415, 0
    %v495 = vsel %vm442, %v416, 0
    %v498 = vsel %vm442, %v417, 0
    %v501 = vsel %vm442, %v418, 0
    %v504 = vsel %vm442, %v419, 0
    %v507 = vsel %vm442, %v420, 0
    %v510 = vsel %vm442, %v421, 0
    %v513 = vsel %vm442, %v422, 0
    %v516 = vsel %vm442, %v423, 0
    %v519 = vsel %vm442, %v424, 0
    %v522 = vsel %vm442, %v425, 0
    %v525 = vsel %vm442, %v426, 0
    %v528 = vsel %vm442, %v427, 0
    %v531 = vsel %vm442, %v428, 0
    %v534 = vsel %vm442, %v429, 0
    %v537 = vsel %vm442, %v430, 0
    %539 = vmatprep.subr.mxu0 0.0
    %540 = vmatpush1.msra.mxu0 %v431
    %541 = vmatprep.subr.mxu0 0.0
    %542 = vmatpush1.msra.mxu0 %v432
    %543 = vmatprep.subr.mxu0 0.0
    %544 = vmatpush1.msra.mxu0 %v433
    %545 = vmatprep.subr.mxu0 0.0
    %546 = vmatpush1.msra.mxu0 %v434
    %547 = vmatprep.subr.mxu0 0.0
    %548 = vmatpush1.msra.mxu0 0.0
    %549 = vmatprep.subr.mxu0 0.0
    %550 = vmatpush1.msra.mxu0 0.0
    %551 = vmatprep.subr.mxu0 0.0
    %552 = vmatpush1.msra.mxu0 0.0
    %553 = vmatprep.subr.mxu0 0.0
    %554 = vmatpush1.msra.mxu0 0.0
    %555 = vmatprep.subr.mxu0 0.0
    %556 = vmatpush1.msra.mxu0 0.0
    %557 = vmatprep.subr.mxu0 0.0
    %558 = vmatpush1.msra.mxu0 0.0
    %559 = vmatprep.subr.mxu0 0.0
    %560 = vmatpush1.msra.mxu0 0.0
    %561 = vmatprep.subr.mxu0 0.0
    %562 = vmatpush1.msra.mxu0 0.0
    %563 = vmatprep.subr.mxu0 0.0
    %564 = vmatpush1.msra.mxu0 0.0
    %565 = vmatprep.subr.mxu0 0.0
    %566 = vmatpush1.msra.mxu0 0.0
    %567 = vmatprep.subr.mxu0 0.0
    %568 = vmatpush1.msra.mxu0 0.0
    %569 = vmatprep.subr.mxu0 0.0
    %570 = vmatpush1.msra.mxu0 0.0
    %571 = vmatprep.subr.mxu0 0.0
    %572 = vmatpush1.msra.mxu0 0.0
    %573 = vmatprep.subr.mxu0 0.0
    %574 = vmatpush1.msra.mxu0 0.0
    %575 = vmatprep.subr.mxu0 0.0
    %576 = vmatpush1.msra.mxu0 0.0
    %577 = vmatprep.subr.mxu0 0.0
    %578 = vmatpush1.msra.mxu0 0.0
    %579 = vmatprep.subr.mxu0 0.0
    %580 = vmatpush1.msra.mxu0 0.0
    %581 = vmatprep.subr.mxu0 0.0
    %582 = vmatpush1.msra.mxu0 0.0
    %583 = vmatprep.subr.mxu0 0.0
    %584 = vmatpush1.msra.mxu0 0.0
    %585 = vmatprep.subr.mxu0 0.0
    %586 = vmatpush1.msra.mxu0 0.0
    %587 = vmatprep.subr.mxu0 0.0
    %588 = vmatpush1.msra.mxu0 0.0
    %589 = vmatprep.subr.mxu0 0.0
    %590 = vmatpush1.msra.mxu0 0.0
    %591 = vmatprep.subr.mxu0 0.0
    %592 = vmatpush1.msra.mxu0 0.0
    %593 = vmatprep.subr.mxu0 0.0
    %594 = vmatpush1.msra.mxu0 0.0
    %595 = vmatprep.subr.mxu0 0.0
    %596 = vmatpush1.msra.mxu0 0.0
    %597 = vmatprep.subr.mxu0 0.0
    %598 = vmatpush1.msra.mxu0 0.0
    %599 = vmatprep.subr.mxu0 0.0
    %600 = vmatpush1.msra.mxu0 0.0
    %601 = vmatprep.subr.mxu0 0.0
    %602 = vmatpush1.msra.mxu0 0.0
    %603 = vmatprep.mubr.f32.mxu0 0.0
    %604 = vmatmul.mubr.f32.gmra.mrb[0].mxu0 %v444
    %v605 = vpop.f32.mrb[0].mxu0
    %v606 = vadd.f32 %v440, %v605
    %v607 = vpop.f32.mrb[0].mxu0
    %608 = vmatprep.mubr.f32.mxu0 0.0
    %609 = vmatmul.mubr.f32.gmra.mrb[0].mxu0 %v447
    %v610 = vpop.f32.mrb[0].mxu0
    %v611 = vadd.f32 %v440, %v610
    %v612 = vpop.f32.mrb[0].mxu0
    %613 = vmatprep.mubr.f32.mxu0 0.0
    %614 = vmatmul.mubr.f32.gmra.mrb[0].mxu0 %v450
    %v615 = vpop.f32.mrb[0].mxu0
    %v616 = vadd.f32 %v440, %v615
    %v617 = vpop.f32.mrb[0].mxu0
    %618 = vmatprep.mubr.f32.mxu0 0.0
    %619 = vmatmul.mubr.f32.gmra.mrb[0].mxu0 %v453
    %v620 = vpop.f32.mrb[0].mxu0
    %v621 = vadd.f32 %v440, %v620
    %v622 = vpop.f32.mrb[0].mxu0
    %623 = vmatprep.mubr.f32.mxu0 0.0
    %624 = vmatmul.mubr.f32.gmra.mrb[0].mxu0 %v456
    %v625 = vpop.f32.mrb[0].mxu0
    %v626 = vadd.f32 %v440, %v625
    %v627 = vpop.f32.mrb[0].mxu0
    %628 = vmatprep.mubr.f32.mxu0 0.0
    %629 = vmatmul.mubr.f32.gmra.mrb[0].mxu0 %v459
    %v630 = vpop.f32.mrb[0].mxu0
    %v631 = vadd.f32 %v440, %v630
    %v632 = vpop.f32.mrb[0].mxu0
    %633 = vmatprep.mubr.f32.mxu0 0.0
    %634 = vmatmul.mubr.f32.gmra.mrb[0].mxu0 %v462
    %v635 = vpop.f32.mrb[0].mxu0
    %v636 = vadd.f32 %v440, %v635
    %v637 = vpop.f32.mrb[0].mxu0
    %638 = vmatprep.mubr.f32.mxu0 0.0
    %639 = vmatmul.mubr.f32.gmra.mrb[0].mxu0 %v465
    %v640 = vpop.f32.mrb[0].mxu0
    %v641 = vadd.f32 %v440, %v640
    %v642 = vpop.f32.mrb[0].mxu0
    %643 = vmatprep.mubr.f32.mxu0 0.0
    %644 = vmatmul.mubr.f32.gmra.mrb[0].mxu0 %v468
    %v645 = vpop.f32.mrb[0].mxu0
    %v646 = vadd.f32 %v440, %v645
    %v647 = vpop.f32.mrb[0].mxu0
    %648 = vmatprep.mubr.f32.mxu0 0.0
    %649 = vmatmul.mubr.f32.gmra.mrb[0].mxu0 %v471
    %v650 = vpop.f32.mrb[0].mxu0
    %v651 = vadd.f32 %v440, %v650
    %v652 = vpop.f32.mrb[0].mxu0
    %653 = vmatprep.mubr.f32.mxu0 0.0
    %654 = vmatmul.mubr.f32.gmra.mrb[0].mxu0 %v474
    %v655 = vpop.f32.mrb[0].mxu0
    %v656 = vadd.f32 %v440, %v655
    %v657 = vpop.f32.mrb[0].mxu0
    %658 = vmatprep.mubr.f32.mxu0 0.0
    %659 = vmatmul.mubr.f32.gmra.mrb[0].mxu0 %v477
    %v660 = vpop.f32.mrb[0].mxu0
    %v661 = vadd.f32 %v440, %v660
    %v662 = vpop.f32.mrb[0].mxu0
    %663 = vmatprep.mubr.f32.mxu0 0.0
    %664 = vmatmul.mubr.f32.gmra.mrb[0].mxu0 %v480
    %v665 = vpop.f32.mrb[0].mxu0
    %v666 = vadd.f32 %v440, %v665
    %v667 = vpop.f32.mrb[0].mxu0
    %668 = vmatprep.mubr.f32.mxu0 0.0
    %669 = vmatmul.mubr.f32.gmra.mrb[0].mxu0 %v483
    %v670 = vpop.f32.mrb[0].mxu0
    %v671 = vadd.f32 %v440, %v670
    %v672 = vpop.f32.mrb[0].mxu0
    %673 = vmatprep.mubr.f32.mxu0 0.0
    %674 = vmatmul.mubr.f32.gmra.mrb[0].mxu0 %v486
    %v675 = vpop.f32.mrb[0].mxu0
    %v676 = vadd.f32 %v440, %v675
    %v677 = vpop.f32.mrb[0].mxu0
    %678 = vmatprep.mubr.f32.mxu0 0.0
    %679 = vmatmul.mubr.f32.gmra.mrb[0].mxu0 %v489
    %v680 = vpop.f32.mrb[0].mxu0
    %v681 = vadd.f32 %v440, %v680
    %v682 = vpop.f32.mrb[0].mxu0
    %683 = vmatprep.mubr.f32.mxu0 0.0
    %684 = vmatmul.mubr.f32.gmra.mrb[0].mxu0 %v492
    %v685 = vpop.f32.mrb[0].mxu0
    %v686 = vadd.f32 %v440, %v685
    %v687 = vpop.f32.mrb[0].mxu0
    %688 = vmatprep.mubr.f32.mxu0 0.0
    %689 = vmatmul.mubr.f32.gmra.mrb[0].mxu0 %v495
    %v690 = vpop.f32.mrb[0].mxu0
    %v691 = vadd.f32 %v440, %v690
    %v692 = vpop.f32.mrb[0].mxu0
    %693 = vmatprep.mubr.f32.mxu0 0.0
    %694 = vmatmul.mubr.f32.gmra.mrb[0].mxu0 %v498
    %v695 = vpop.f32.mrb[0].mxu0
    %v696 = vadd.f32 %v440, %v695
    %v697 = vpop.f32.mrb[0].mxu0
    %698 = vmatprep.mubr.f32.mxu0 0.0
    %699 = vmatmul.mubr.f32.gmra.mrb[0].mxu0 %v501
    %v700 = vpop.f32.mrb[0].mxu0
    %v701 = vadd.f32 %v440, %v700
    %v702 = vpop.f32.mrb[0].mxu0
    %703 = vmatprep.mubr.f32.mxu0 0.0
    %704 = vmatmul.mubr.f32.gmra.mrb[0].mxu0 %v504
    %v705 = vpop.f32.mrb[0].mxu0
    %v706 = vadd.f32 %v440, %v705
    %v707 = vpop.f32.mrb[0].mxu0
    %708 = vmatprep.mubr.f32.mxu0 0.0
    %709 = vmatmul.mubr.f32.gmra.mrb[0].mxu0 %v507
    %v710 = vpop.f32.mrb[0].mxu0
    %v711 = vadd.f32 %v440, %v710
    %v712 = vpop.f32.mrb[0].mxu0
    %713 = vmatprep.mubr.f32.mxu0 0.0
    %714 = vmatmul.mubr.f32.gmra.mrb[0].mxu0 %v510
    %v715 = vpop.f32.mrb[0].mxu0
    %v716 = vadd.f32 %v440, %v715
    %v717 = vpop.f32.mrb[0].mxu0
    %718 = vmatprep.mubr.f32.mxu0 0.0
    %719 = vmatmul.mubr.f32.gmra.mrb[0].mxu0 %v513
    %v720 = vpop.f32.mrb[0].mxu0
    %v721 = vadd.f32 %v440, %v720
    %v722 = vpop.f32.mrb[0].mxu0
    %723 = vmatprep.mubr.f32.mxu0 0.0
    %724 = vmatmul.mubr.f32.gmra.mrb[0].mxu0 %v516
    %v725 = vpop.f32.mrb[0].mxu0
    %v726 = vadd.f32 %v440, %v725
    %v727 = vpop.f32.mrb[0].mxu0
    %728 = vmatprep.mubr.f32.mxu0 0.0
    %729 = vmatmul.mubr.f32.gmra.mrb[0].mxu0 %v519
    %v730 = vpop.f32.mrb[0].mxu0
    %v731 = vadd.f32 %v440, %v730
    %v732 = vpop.f32.mrb[0].mxu0
    %733 = vmatprep.mubr.f32.mxu0 0.0
    %734 = vmatmul.mubr.f32.gmra.mrb[0].mxu0 %v522
    %v735 = vpop.f32.mrb[0].mxu0
    %v736 = vadd.f32 %v440, %v735
    %v737 = vpop.f32.mrb[0].mxu0
    %738 = vmatprep.mubr.f32.mxu0 0.0
    %739 = vmatmul.mubr.f32.gmra.mrb[0].mxu0 %v525
    %v740 = vpop.f32.mrb[0].mxu0
    %v741 = vadd.f32 %v440, %v740
    %v742 = vpop.f32.mrb[0].mxu0
    %743 = vmatprep.mubr.f32.mxu0 0.0
    %744 = vmatmul.mubr.f32.gmra.mrb[0].mxu0 %v528
    %v745 = vpop.f32.mrb[0].mxu0
    %v746 = vadd.f32 %v440, %v745
    %v747 = vpop.f32.mrb[0].mxu0
    %748 = vmatprep.mubr.f32.mxu0 0.0
    %749 = vmatmul.mubr.f32.gmra.mrb[0].mxu0 %v531
    %v750 = vpop.f32.mrb[0].mxu0
    %v751 = vadd.f32 %v440, %v750
    %v752 = vpop.f32.mrb[0].mxu0
    %753 = vmatprep.mubr.f32.mxu0 0.0
    %754 = vmatmul.mubr.f32.gmra.mrb[0].mxu0 %v534
    %v755 = vpop.f32.mrb[0].mxu0
    %v756 = vadd.f32 %v440, %v755
    %v757 = vpop.f32.mrb[0].mxu0
    %758 = vmatprep.mubr.f32.mxu0 0.0
    %759 = vmatmul.mubr.f32.gmra.mrb[0].mxu0 %v537
    %v760 = vpop.f32.mrb[0].mxu0
    %v761 = vadd.f32 %v440, %v760
    %v762 = vpop.f32.mrb[0].mxu0
    %763 = vdwg.mxu0
    %v764 = vmax.f32 %v606, 0.0
    %v765 = vmax.f32 %v611, 0.0
    %v766 = vmax.f32 %v616, 0.0
    %v767 = vmax.f32 %v621, 0.0
    %v768 = vmax.f32 %v626, 0.0
    %v769 = vmax.f32 %v631, 0.0
    %v770 = vmax.f32 %v636, 0.0
    %v771 = vmax.f32 %v641, 0.0
    %v772 = vmax.f32 %v646, 0.0
    %v773 = vmax.f32 %v651, 0.0
    %v774 = vmax.f32 %v656, 0.0
    %v775 = vmax.f32 %v661, 0.0
    %v776 = vmax.f32 %v666, 0.0
    %v777 = vmax.f32 %v671, 0.0
    %v778 = vmax.f32 %v676, 0.0
    %v779 = vmax.f32 %v681, 0.0
    %v780 = vmax.f32 %v686, 0.0
    %v781 = vmax.f32 %v691, 0.0
    %v782 = vmax.f32 %v696, 0.0
    %v783 = vmax.f32 %v701, 0.0
    %v784 = vmax.f32 %v706, 0.0
    %v785 = vmax.f32 %v711, 0.0
    %v786 = vmax.f32 %v716, 0.0
    %v787 = vmax.f32 %v721, 0.0
    %v788 = vmax.f32 %v726, 0.0
    %v789 = vmax.f32 %v731, 0.0
    %v790 = vmax.f32 %v736, 0.0
    %v791 = vmax.f32 %v741, 0.0
    %v792 = vmax.f32 %v746, 0.0
    %v793 = vmax.f32 %v751, 0.0
    %v794 = vmax.f32 %v756, 0.0
    %v795 = vmax.f32 %v761, 0.0
    %v796 = vld [vmem:[%s5] sm:$0xff]
    %v797 = vld [vmem:[%s5 + $0x8] sm:$0xff]
    %v798 = vld [vmem:[%s5 + $0x10] sm:$0xff]
    %v799 = vld [vmem:[%s5 + $0x18] sm:$0xff]
    %v800 = vld [vmem:[%s6] sm:$0x1]
    %v802 = vlaneseq
    %v803 = vshrl.u32 %v802, 7
    %v804 = vsub.s32 0, %v803
    %v805 = vrot.slane %v800, %v804
    %v808 = vsel %vm442, %v764, 0
    %v811 = vsel %vm442, %v765, 0
    %v814 = vsel %vm442, %v766, 0
    %v817 = vsel %vm442, %v767, 0
    %v820 = vsel %vm442, %v768, 0
    %v823 = vsel %vm442, %v769, 0
    %v826 = vsel %vm442, %v770, 0
    %v829 = vsel %vm442, %v771, 0
    %v832 = vsel %vm442, %v772, 0
    %v835 = vsel %vm442, %v773, 0
    %v838 = vsel %vm442, %v774, 0
    %v841 = vsel %vm442, %v775, 0
    %v844 = vsel %vm442, %v776, 0
    %v847 = vsel %vm442, %v777, 0
    %v850 = vsel %vm442, %v778, 0
    %v853 = vsel %vm442, %v779, 0
    %v856 = vsel %vm442, %v780, 0
    %v859 = vsel %vm442, %v781, 0
    %v862 = vsel %vm442, %v782, 0
    %v865 = vsel %vm442, %v783, 0
    %v868 = vsel %vm442, %v784, 0
    %v871 = vsel %vm442, %v785, 0
    %v874 = vsel %vm442, %v786, 0
    %v877 = vsel %vm442, %v787, 0
    %v880 = vsel %vm442, %v788, 0
    %v883 = vsel %vm442, %v789, 0
    %v886 = vsel %vm442, %v790, 0
    %v889 = vsel %vm442, %v791, 0
    %v892 = vsel %vm442, %v792, 0
    %v895 = vsel %vm442, %v793, 0
    %v898 = vsel %vm442, %v794, 0
    %v901 = vsel %vm442, %v795, 0
    %903 = vmatprep.subr.mxu0 0.0
    %904 = vmatpush1.msra.mxu0 %v796
    %905 = vmatprep.subr.mxu0 0.0
    %906 = vmatpush1.msra.mxu0 %v797
    %907 = vmatprep.subr.mxu0 0.0
    %908 = vmatpush1.msra.mxu0 %v798
    %909 = vmatprep.subr.mxu0 0.0
    %910 = vmatpush1.msra.mxu0 %v799
    %911 = vmatprep.subr.mxu0 0.0
    %912 = vmatpush1.msra.mxu0 0.0
    %913 = vmatprep.subr.mxu0 0.0
    %914 = vmatpush1.msra.mxu0 0.0
    %915 = vmatprep.subr.mxu0 0.0
    %916 = vmatpush1.msra.mxu0 0.0
    %917 = vmatprep.subr.mxu0 0.0
    %918 = vmatpush1.msra.mxu0 0.0
    %919 = vmatprep.subr.mxu0 0.0
    %920 = vmatpush1.msra.mxu0 0.0
    %921 = vmatprep.subr.mxu0 0.0
    %922 = vmatpush1.msra.mxu0 0.0
    %923 = vmatprep.subr.mxu0 0.0
    %924 = vmatpush1.msra.mxu0 0.0
    %925 = vmatprep.subr.mxu0 0.0
    %926 = vmatpush1.msra.mxu0 0.0
    %927 = vmatprep.subr.mxu0 0.0
    %928 = vmatpush1.msra.mxu0 0.0
    %929 = vmatprep.subr.mxu0 0.0
    %930 = vmatpush1.msra.mxu0 0.0
    %931 = vmatprep.subr.mxu0 0.0
    %932 = vmatpush1.msra.mxu0 0.0
    %933 = vmatprep.subr.mxu0 0.0
    %934 = vmatpush1.msra.mxu0 0.0
    %935 = vmatprep.subr.mxu0 0.0
    %936 = vmatpush1.msra.mxu0 0.0
    %937 = vmatprep.subr.mxu0 0.0
    %938 = vmatpush1.msra.mxu0 0.0
    %939 = vmatprep.subr.mxu0 0.0
    %940 = vmatpush1.msra.mxu0 0.0
    %941 = vmatprep.subr.mxu0 0.0
    %942 = vmatpush1.msra.mxu0 0.0
    %943 = vmatprep.subr.mxu0 0.0
    %944 = vmatpush1.msra.mxu0 0.0
    %945 = vmatprep.subr.mxu0 0.0
    %946 = vmatpush1.msra.mxu0 0.0
    %947 = vmatprep.subr.mxu0 0.0
    %948 = vmatpush1.msra.mxu0 0.0
    %949 = vmatprep.subr.mxu0 0.0
    %950 = vmatpush1.msra.mxu0 0.0
    %951 = vmatprep.subr.mxu0 0.0
    %952 = vmatpush1.msra.mxu0 0.0
    %953 = vmatprep.subr.mxu0 0.0
    %954 = vmatpush1.msra.mxu0 0.0
    %955 = vmatprep.subr.mxu0 0.0
    %956 = vmatpush1.msra.mxu0 0.0
    %957 = vmatprep.subr.mxu0 0.0
    %958 = vmatpush1.msra.mxu0 0.0
    %959 = vmatprep.subr.mxu0 0.0
    %960 = vmatpush1.msra.mxu0 0.0
    %961 = vmatprep.subr.mxu0 0.0
    %962 = vmatpush1.msra.mxu0 0.0
    %963 = vmatprep.subr.mxu0 0.0
    %964 = vmatpush1.msra.mxu0 0.0
    %965 = vmatprep.subr.mxu0 0.0
    %966 = vmatpush1.msra.mxu0 0.0
    %967 = vmatprep.mubr.f32.mxu0 0.0
    %968 = vmatmul.mubr.f32.gmra.mrb[0].mxu0 %v808
    %v969 = vpop.f32.mrb[0].mxu0
    %v970 = vadd.f32 %v805, %v969
    %v971 = vpop.f32.mrb[0].mxu0
    %972 = vmatprep.mubr.f32.mxu0 0.0
    %973 = vmatmul.mubr.f32.gmra.mrb[0].mxu0 %v811
    %v974 = vpop.f32.mrb[0].mxu0
    %v975 = vadd.f32 %v805, %v974
    %v976 = vpop.f32.mrb[0].mxu0
    %977 = vmatprep.mubr.f32.mxu0 0.0
    %978 = vmatmul.mubr.f32.gmra.mrb[0].mxu0 %v814
    %v979 = vpop.f32.mrb[0].mxu0
    %v980 = vadd.f32 %v805, %v979
    %v981 = vpop.f32.mrb[0].mxu0
    %982 = vmatprep.mubr.f32.mxu0 0.0
    %983 = vmatmul.mubr.f32.gmra.mrb[0].mxu0 %v817
    %v984 = vpop.f32.mrb[0].mxu0
    %v985 = vadd.f32 %v805, %v984
    %v986 = vpop.f32.mrb[0].mxu0
    %987 = vmatprep.mubr.f32.mxu0 0.0
    %988 = vmatmul.mubr.f32.gmra.mrb[0].mxu0 %v820
    %v989 = vpop.f32.mrb[0].mxu0
    %v990 = vadd.f32 %v805, %v989
    %v991 = vpop.f32.mrb[0].mxu0
    %992 = vmatprep.mubr.f32.mxu0 0.0
    %993 = vmatmul.mubr.f32.gmra.mrb[0].mxu0 %v823
    %v994 = vpop.f32.mrb[0].mxu0
    %v995 = vadd.f32 %v805, %v994
    %v996 = vpop.f32.mrb[0].mxu0
    %997 = vmatprep.mubr.f32.mxu0 0.0
    %998 = vmatmul.mubr.f32.gmra.mrb[0].mxu0 %v826
    %v999 = vpop.f32.mrb[0].mxu0
    %v1000 = vadd.f32 %v805, %v999
    %v1001 = vpop.f32.mrb[0].mxu0
    %1002 = vmatprep.mubr.f32.mxu0 0.0
    %1003 = vmatmul.mubr.f32.gmra.mrb[0].mxu0 %v829
    %v1004 = vpop.f32.mrb[0].mxu0
    %v1005 = vadd.f32 %v805, %v1004
    %v1006 = vpop.f32.mrb[0].mxu0
    %1007 = vmatprep.mubr.f32.mxu0 0.0
    %1008 = vmatmul.mubr.f32.gmra.mrb[0].mxu0 %v832
    %v1009 = vpop.f32.mrb[0].mxu0
    %v1010 = vadd.f32 %v805, %v1009
    %v1011 = vpop.f32.mrb[0].mxu0
    %1012 = vmatprep.mubr.f32.mxu0 0.0
    %1013 = vmatmul.mubr.f32.gmra.mrb[0].mxu0 %v835
    %v1014 = vpop.f32.mrb[0].mxu0
    %v1015 = vadd.f32 %v805, %v1014
    %v1016 = vpop.f32.mrb[0].mxu0
    %1017 = vmatprep.mubr.f32.mxu0 0.0
    %1018 = vmatmul.mubr.f32.gmra.mrb[0].mxu0 %v838
    %v1019 = vpop.f32.mrb[0].mxu0
    %v1020 = vadd.f32 %v805, %v1019
    %v1021 = vpop.f32.mrb[0].mxu0
    %1022 = vmatprep.mubr.f32.mxu0 0.0
    %1023 = vmatmul.mubr.f32.gmra.mrb[0].mxu0 %v841
    %v1024 = vpop.f32.mrb[0].mxu0
    %v1025 = vadd.f32 %v805, %v1024
    %v1026 = vpop.f32.mrb[0].mxu0
    %1027 = vmatprep.mubr.f32.mxu0 0.0
    %1028 = vmatmul.mubr.f32.gmra.mrb[0].mxu0 %v844
    %v1029 = vpop.f32.mrb[0].mxu0
    %v1030 = vadd.f32 %v805, %v1029
    %v1031 = vpop.f32.mrb[0].mxu0
    %1032 = vmatprep.mubr.f32.mxu0 0.0
    %1033 = vmatmul.mubr.f32.gmra.mrb[0].mxu0 %v847
    %v1034 = vpop.f32.mrb[0].mxu0
    %v1035 = vadd.f32 %v805, %v1034
    %v1036 = vpop.f32.mrb[0].mxu0
    %1037 = vmatprep.mubr.f32.mxu0 0.0
    %1038 = vmatmul.mubr.f32.gmra.mrb[0].mxu0 %v850
    %v1039 = vpop.f32.mrb[0].mxu0
    %v1040 = vadd.f32 %v805, %v1039
    %v1041 = vpop.f32.mrb[0].mxu0
    %1042 = vmatprep.mubr.f32.mxu0 0.0
    %1043 = vmatmul.mubr.f32.gmra.mrb[0].mxu0 %v853
    %v1044 = vpop.f32.mrb[0].mxu0
    %v1045 = vadd.f32 %v805, %v1044
    %v1046 = vpop.f32.mrb[0].mxu0
    %1047 = vmatprep.mubr.f32.mxu0 0.0
    %1048 = vmatmul.mubr.f32.gmra.mrb[0].mxu0 %v856
    %v1049 = vpop.f32.mrb[0].mxu0
    %v1050 = vadd.f32 %v805, %v1049
    %v1051 = vpop.f32.mrb[0].mxu0
    %1052 = vmatprep.mubr.f32.mxu0 0.0
    %1053 = vmatmul.mubr.f32.gmra.mrb[0].mxu0 %v859
    %v1054 = vpop.f32.mrb[0].mxu0
    %v1055 = vadd.f32 %v805, %v1054
    %v1056 = vpop.f32.mrb[0].mxu0
    %1057 = vmatprep.mubr.f32.mxu0 0.0
    %1058 = vmatmul.mubr.f32.gmra.mrb[0].mxu0 %v862
    %v1059 = vpop.f32.mrb[0].mxu0
    %v1060 = vadd.f32 %v805, %v1059
    %v1061 = vpop.f32.mrb[0].mxu0
    %1062 = vmatprep.mubr.f32.mxu0 0.0
    %1063 = vmatmul.mubr.f32.gmra.mrb[0].mxu0 %v865
    %v1064 = vpop.f32.mrb[0].mxu0
    %v1065 = vadd.f32 %v805, %v1064
    %v1066 = vpop.f32.mrb[0].mxu0
    %1067 = vmatprep.mubr.f32.mxu0 0.0
    %1068 = vmatmul.mubr.f32.gmra.mrb[0].mxu0 %v868
    %v1069 = vpop.f32.mrb[0].mxu0
    %v1070 = vadd.f32 %v805, %v1069
    %v1071 = vpop.f32.mrb[0].mxu0
    %1072 = vmatprep.mubr.f32.mxu0 0.0
    %1073 = vmatmul.mubr.f32.gmra.mrb[0].mxu0 %v871
    %v1074 = vpop.f32.mrb[0].mxu0
    %v1075 = vadd.f32 %v805, %v1074
    %v1076 = vpop.f32.mrb[0].mxu0
    %1077 = vmatprep.mubr.f32.mxu0 0.0
    %1078 = vmatmul.mubr.f32.gmra.mrb[0].mxu0 %v874
    %v1079 = vpop.f32.mrb[0].mxu0
    %v1080 = vadd.f32 %v805, %v1079
    %v1081 = vpop.f32.mrb[0].mxu0
    %1082 = vmatprep.mubr.f32.mxu0 0.0
    %1083 = vmatmul.mubr.f32.gmra.mrb[0].mxu0 %v877
    %v1084 = vpop.f32.mrb[0].mxu0
    %v1085 = vadd.f32 %v805, %v1084
    %v1086 = vpop.f32.mrb[0].mxu0
    %1087 = vmatprep.mubr.f32.mxu0 0.0
    %1088 = vmatmul.mubr.f32.gmra.mrb[0].mxu0 %v880
    %v1089 = vpop.f32.mrb[0].mxu0
    %v1090 = vadd.f32 %v805, %v1089
    %v1091 = vpop.f32.mrb[0].mxu0
    %1092 = vmatprep.mubr.f32.mxu0 0.0
    %1093 = vmatmul.mubr.f32.gmra.mrb[0].mxu0 %v883
    %v1094 = vpop.f32.mrb[0].mxu0
    %v1095 = vadd.f32 %v805, %v1094
    %v1096 = vpop.f32.mrb[0].mxu0
    %1097 = vmatprep.mubr.f32.mxu0 0.0
    %1098 = vmatmul.mubr.f32.gmra.mrb[0].mxu0 %v886
    %v1099 = vpop.f32.mrb[0].mxu0
    %v1100 = vadd.f32 %v805, %v1099
    %v1101 = vpop.f32.mrb[0].mxu0
    %1102 = vmatprep.mubr.f32.mxu0 0.0
    %1103 = vmatmul.mubr.f32.gmra.mrb[0].mxu0 %v889
    %v1104 = vpop.f32.mrb[0].mxu0
    %v1105 = vadd.f32 %v805, %v1104
    %v1106 = vpop.f32.mrb[0].mxu0
    %1107 = vmatprep.mubr.f32.mxu0 0.0
    %1108 = vmatmul.mubr.f32.gmra.mrb[0].mxu0 %v892
    %v1109 = vpop.f32.mrb[0].mxu0
    %v1110 = vadd.f32 %v805, %v1109
    %v1111 = vpop.f32.mrb[0].mxu0
    %1112 = vmatprep.mubr.f32.mxu0 0.0
    %1113 = vmatmul.mubr.f32.gmra.mrb[0].mxu0 %v895
    %v1114 = vpop.f32.mrb[0].mxu0
    %v1115 = vadd.f32 %v805, %v1114
    %v1116 = vpop.f32.mrb[0].mxu0
    %1117 = vmatprep.mubr.f32.mxu0 0.0
    %1118 = vmatmul.mubr.f32.gmra.mrb[0].mxu0 %v898
    %v1119 = vpop.f32.mrb[0].mxu0
    %v1120 = vadd.f32 %v805, %v1119
    %v1121 = vpop.f32.mrb[0].mxu0
    %1122 = vmatprep.mubr.f32.mxu0 0.0
    %1123 = vmatmul.mubr.f32.gmra.mrb[0].mxu0 %v901
    %v1124 = vpop.f32.mrb[0].mxu0
    %v1125 = vadd.f32 %v805, %v1124
    %v1126 = vpop.f32.mrb[0].mxu0
    %1127 = vdwg.mxu0
    %v1128 = vmax.f32 %v970, 0.0
    %v1129 = vmax.f32 %v975, 0.0
    %v1130 = vmax.f32 %v980, 0.0
    %v1131 = vmax.f32 %v985, 0.0
    %v1132 = vmax.f32 %v990, 0.0
    %v1133 = vmax.f32 %v995, 0.0
    %v1134 = vmax.f32 %v1000, 0.0
    %v1135 = vmax.f32 %v1005, 0.0
    %v1136 = vmax.f32 %v1010, 0.0
    %v1137 = vmax.f32 %v1015, 0.0
    %v1138 = vmax.f32 %v1020, 0.0
    %v1139 = vmax.f32 %v1025, 0.0
    %v1140 = vmax.f32 %v1030, 0.0
    %v1141 = vmax.f32 %v1035, 0.0
    %v1142 = vmax.f32 %v1040, 0.0
    %v1143 = vmax.f32 %v1045, 0.0
    %v1144 = vmax.f32 %v1050, 0.0
    %v1145 = vmax.f32 %v1055, 0.0
    %v1146 = vmax.f32 %v1060, 0.0
    %v1147 = vmax.f32 %v1065, 0.0
    %v1148 = vmax.f32 %v1070, 0.0
    %v1149 = vmax.f32 %v1075, 0.0
    %v1150 = vmax.f32 %v1080, 0.0
    %v1151 = vmax.f32 %v1085, 0.0
    %v1152 = vmax.f32 %v1090, 0.0
    %v1153 = vmax.f32 %v1095, 0.0
    %v1154 = vmax.f32 %v1100, 0.0
    %v1155 = vmax.f32 %v1105, 0.0
    %v1156 = vmax.f32 %v1110, 0.0
    %v1157 = vmax.f32 %v1115, 0.0
    %v1158 = vmax.f32 %v1120, 0.0
    %v1159 = vmax.f32 %v1125, 0.0
    %v1160 = vld [vmem:[%s7] sm:$0xff]
    %v1161 = vld [vmem:[%s7 + $0x8] sm:$0xff]
    %v1162 = vld [vmem:[%s7 + $0x10] sm:$0xff]
    %v1163 = vld [vmem:[%s7 + $0x18] sm:$0xff]
    %v1164 = vld [vmem:[%s8] sm:$0x1]
    %v1166 = vlaneseq
    %v1167 = vshrl.u32 %v1166, 7
    %v1168 = vsub.s32 0, %v1167
    %v1169 = vrot.slane %v1164, %v1168
    %v1172 = vsel %vm442, %v1128, 0
    %v1175 = vsel %vm442, %v1129, 0
    %v1178 = vsel %vm442, %v1130, 0
    %v1181 = vsel %vm442, %v1131, 0
    %v1184 = vsel %vm442, %v1132, 0
    %v1187 = vsel %vm442, %v1133, 0
    %v1190 = vsel %vm442, %v1134, 0
    %v1193 = vsel %vm442, %v1135, 0
    %v1196 = vsel %vm442, %v1136, 0
    %v1199 = vsel %vm442, %v1137, 0
    %v1202 = vsel %vm442, %v1138, 0
    %v1205 = vsel %vm442, %v1139, 0
    %v1208 = vsel %vm442, %v1140, 0
    %v1211 = vsel %vm442, %v1141, 0
    %v1214 = vsel %vm442, %v1142, 0
    %v1217 = vsel %vm442, %v1143, 0
    %v1220 = vsel %vm442, %v1144, 0
    %v1223 = vsel %vm442, %v1145, 0
    %v1226 = vsel %vm442, %v1146, 0
    %v1229 = vsel %vm442, %v1147, 0
    %v1232 = vsel %vm442, %v1148, 0
    %v1235 = vsel %vm442, %v1149, 0
    %v1238 = vsel %vm442, %v1150, 0
    %v1241 = vsel %vm442, %v1151, 0
    %v1244 = vsel %vm442, %v1152, 0
    %v1247 = vsel %vm442, %v1153, 0
    %v1250 = vsel %vm442, %v1154, 0
    %v1253 = vsel %vm442, %v1155, 0
    %v1256 = vsel %vm442, %v1156, 0
    %v1259 = vsel %vm442, %v1157, 0
    %v1262 = vsel %vm442, %v1158, 0
    %v1265 = vsel %vm442, %v1159, 0
    %1267 = vmatprep.subr.mxu0 0.0
    %1268 = vmatpush1.msra.mxu0 %v1160
    %1269 = vmatprep.subr.mxu0 0.0
    %1270 = vmatpush1.msra.mxu0 %v1161
    %1271 = vmatprep.subr.mxu0 0.0
    %1272 = vmatpush1.msra.mxu0 %v1162
    %1273 = vmatprep.subr.mxu0 0.0
    %1274 = vmatpush1.msra.mxu0 %v1163
    %1275 = vmatprep.subr.mxu0 0.0
    %1276 = vmatpush1.msra.mxu0 0.0
    %1277 = vmatprep.subr.mxu0 0.0
    %1278 = vmatpush1.msra.mxu0 0.0
    %1279 = vmatprep.subr.mxu0 0.0
    %1280 = vmatpush1.msra.mxu0 0.0
    %1281 = vmatprep.subr.mxu0 0.0
    %1282 = vmatpush1.msra.mxu0 0.0
    %1283 = vmatprep.subr.mxu0 0.0
    %1284 = vmatpush1.msra.mxu0 0.0
    %1285 = vmatprep.subr.mxu0 0.0
    %1286 = vmatpush1.msra.mxu0 0.0
    %1287 = vmatprep.subr.mxu0 0.0
    %1288 = vmatpush1.msra.mxu0 0.0
    %1289 = vmatprep.subr.mxu0 0.0
    %1290 = vmatpush1.msra.mxu0 0.0
    %1291 = vmatprep.subr.mxu0 0.0
    %1292 = vmatpush1.msra.mxu0 0.0
    %1293 = vmatprep.subr.mxu0 0.0
    %1294 = vmatpush1.msra.mxu0 0.0
    %1295 = vmatprep.subr.mxu0 0.0
    %1296 = vmatpush1.msra.mxu0 0.0
    %1297 = vmatprep.subr.mxu0 0.0
    %1298 = vmatpush1.msra.mxu0 0.0
    %1299 = vmatprep.subr.mxu0 0.0
    %1300 = vmatpush1.msra.mxu0 0.0
    %1301 = vmatprep.subr.mxu0 0.0
    %1302 = vmatpush1.msra.mxu0 0.0
    %1303 = vmatprep.subr.mxu0 0.0
    %1304 = vmatpush1.msra.mxu0 0.0
    %1305 = vmatprep.subr.mxu0 0.0
    %1306 = vmatpush1.msra.mxu0 0.0
    %1307 = vmatprep.subr.mxu0 0.0
    %1308 = vmatpush1.msra.mxu0 0.0
    %1309 = vmatprep.subr.mxu0 0.0
    %1310 = vmatpush1.msra.mxu0 0.0
    %1311 = vmatprep.subr.mxu0 0.0
    %1312 = vmatpush1.msra.mxu0 0.0
    %1313 = vmatprep.subr.mxu0 0.0
    %1314 = vmatpush1.msra.mxu0 0.0
    %1315 = vmatprep.subr.mxu0 0.0
    %1316 = vmatpush1.msra.mxu0 0.0
    %1317 = vmatprep.subr.mxu0 0.0
    %1318 = vmatpush1.msra.mxu0 0.0
    %1319 = vmatprep.subr.mxu0 0.0
    %1320 = vmatpush1.msra.mxu0 0.0
    %1321 = vmatprep.subr.mxu0 0.0
    %1322 = vmatpush1.msra.mxu0 0.0
    %1323 = vmatprep.subr.mxu0 0.0
    %1324 = vmatpush1.msra.mxu0 0.0
    %1325 = vmatprep.subr.mxu0 0.0
    %1326 = vmatpush1.msra.mxu0 0.0
    %1327 = vmatprep.subr.mxu0 0.0
    %1328 = vmatpush1.msra.mxu0 0.0
    %1329 = vmatprep.subr.mxu0 0.0
    %1330 = vmatpush1.msra.mxu0 0.0
    %1331 = vmatprep.mubr.f32.mxu0 0.0
    %1332 = vmatmul.mubr.f32.gmra.mrb[0].mxu0 %v1172
    %v1333 = vpop.f32.mrb[0].mxu0
    %v1334 = vadd.f32 %v1169, %v1333
    %v1335 = vpop.f32.mrb[0].mxu0
    %1336 = vmatprep.mubr.f32.mxu0 0.0
    %1337 = vmatmul.mubr.f32.gmra.mrb[0].mxu0 %v1175
    %v1338 = vpop.f32.mrb[0].mxu0
    %v1339 = vadd.f32 %v1169, %v1338
    %v1340 = vpop.f32.mrb[0].mxu0
    %1341 = vmatprep.mubr.f32.mxu0 0.0
    %1342 = vmatmul.mubr.f32.gmra.mrb[0].mxu0 %v1178
    %v1343 = vpop.f32.mrb[0].mxu0
    %v1344 = vadd.f32 %v1169, %v1343
    %v1345 = vpop.f32.mrb[0].mxu0
    %1346 = vmatprep.mubr.f32.mxu0 0.0
    %1347 = vmatmul.mubr.f32.gmra.mrb[0].mxu0 %v1181
    %v1348 = vpop.f32.mrb[0].mxu0
    %v1349 = vadd.f32 %v1169, %v1348
    %v1350 = vpop.f32.mrb[0].mxu0
    %1351 = vmatprep.mubr.f32.mxu0 0.0
    %1352 = vmatmul.mubr.f32.gmra.mrb[0].mxu0 %v1184
    %v1353 = vpop.f32.mrb[0].mxu0
    %v1354 = vadd.f32 %v1169, %v1353
    %v1355 = vpop.f32.mrb[0].mxu0
    %1356 = vmatprep.mubr.f32.mxu0 0.0
    %1357 = vmatmul.mubr.f32.gmra.mrb[0].mxu0 %v1187
    %v1358 = vpop.f32.mrb[0].mxu0
    %v1359 = vadd.f32 %v1169, %v1358
    %v1360 = vpop.f32.mrb[0].mxu0
    %1361 = vmatprep.mubr.f32.mxu0 0.0
    %1362 = vmatmul.mubr.f32.gmra.mrb[0].mxu0 %v1190
    %v1363 = vpop.f32.mrb[0].mxu0
    %v1364 = vadd.f32 %v1169, %v1363
    %v1365 = vpop.f32.mrb[0].mxu0
    %1366 = vmatprep.mubr.f32.mxu0 0.0
    %1367 = vmatmul.mubr.f32.gmra.mrb[0].mxu0 %v1193
    %v1368 = vpop.f32.mrb[0].mxu0
    %v1369 = vadd.f32 %v1169, %v1368
    %v1370 = vpop.f32.mrb[0].mxu0
    %1371 = vmatprep.mubr.f32.mxu0 0.0
    %1372 = vmatmul.mubr.f32.gmra.mrb[0].mxu0 %v1196
    %v1373 = vpop.f32.mrb[0].mxu0
    %v1374 = vadd.f32 %v1169, %v1373
    %v1375 = vpop.f32.mrb[0].mxu0
    %1376 = vmatprep.mubr.f32.mxu0 0.0
    %1377 = vmatmul.mubr.f32.gmra.mrb[0].mxu0 %v1199
    %v1378 = vpop.f32.mrb[0].mxu0
    %v1379 = vadd.f32 %v1169, %v1378
    %v1380 = vpop.f32.mrb[0].mxu0
    %1381 = vmatprep.mubr.f32.mxu0 0.0
    %1382 = vmatmul.mubr.f32.gmra.mrb[0].mxu0 %v1202
    %v1383 = vpop.f32.mrb[0].mxu0
    %v1384 = vadd.f32 %v1169, %v1383
    %v1385 = vpop.f32.mrb[0].mxu0
    %1386 = vmatprep.mubr.f32.mxu0 0.0
    %1387 = vmatmul.mubr.f32.gmra.mrb[0].mxu0 %v1205
    %v1388 = vpop.f32.mrb[0].mxu0
    %v1389 = vadd.f32 %v1169, %v1388
    %v1390 = vpop.f32.mrb[0].mxu0
    %1391 = vmatprep.mubr.f32.mxu0 0.0
    %1392 = vmatmul.mubr.f32.gmra.mrb[0].mxu0 %v1208
    %v1393 = vpop.f32.mrb[0].mxu0
    %v1394 = vadd.f32 %v1169, %v1393
    %v1395 = vpop.f32.mrb[0].mxu0
    %1396 = vmatprep.mubr.f32.mxu0 0.0
    %1397 = vmatmul.mubr.f32.gmra.mrb[0].mxu0 %v1211
    %v1398 = vpop.f32.mrb[0].mxu0
    %v1399 = vadd.f32 %v1169, %v1398
    %v1400 = vpop.f32.mrb[0].mxu0
    %1401 = vmatprep.mubr.f32.mxu0 0.0
    %1402 = vmatmul.mubr.f32.gmra.mrb[0].mxu0 %v1214
    %v1403 = vpop.f32.mrb[0].mxu0
    %v1404 = vadd.f32 %v1169, %v1403
    %v1405 = vpop.f32.mrb[0].mxu0
    %1406 = vmatprep.mubr.f32.mxu0 0.0
    %1407 = vmatmul.mubr.f32.gmra.mrb[0].mxu0 %v1217
    %v1408 = vpop.f32.mrb[0].mxu0
    %v1409 = vadd.f32 %v1169, %v1408
    %v1410 = vpop.f32.mrb[0].mxu0
    %1411 = vmatprep.mubr.f32.mxu0 0.0
    %1412 = vmatmul.mubr.f32.gmra.mrb[0].mxu0 %v1220
    %v1413 = vpop.f32.mrb[0].mxu0
    %v1414 = vadd.f32 %v1169, %v1413
    %v1415 = vpop.f32.mrb[0].mxu0
    %1416 = vmatprep.mubr.f32.mxu0 0.0
    %1417 = vmatmul.mubr.f32.gmra.mrb[0].mxu0 %v1223
    %v1418 = vpop.f32.mrb[0].mxu0
    %v1419 = vadd.f32 %v1169, %v1418
    %v1420 = vpop.f32.mrb[0].mxu0
    %1421 = vmatprep.mubr.f32.mxu0 0.0
    %1422 = vmatmul.mubr.f32.gmra.mrb[0].mxu0 %v1226
    %v1423 = vpop.f32.mrb[0].mxu0
    %v1424 = vadd.f32 %v1169, %v1423
    %v1425 = vpop.f32.mrb[0].mxu0
    %1426 = vmatprep.mubr.f32.mxu0 0.0
    %1427 = vmatmul.mubr.f32.gmra.mrb[0].mxu0 %v1229
    %v1428 = vpop.f32.mrb[0].mxu0
    %v1429 = vadd.f32 %v1169, %v1428
    %v1430 = vpop.f32.mrb[0].mxu0
    %1431 = vmatprep.mubr.f32.mxu0 0.0
    %1432 = vmatmul.mubr.f32.gmra.mrb[0].mxu0 %v1232
    %v1433 = vpop.f32.mrb[0].mxu0
    %v1434 = vadd.f32 %v1169, %v1433
    %v1435 = vpop.f32.mrb[0].mxu0
    %1436 = vmatprep.mubr.f32.mxu0 0.0
    %1437 = vmatmul.mubr.f32.gmra.mrb[0].mxu0 %v1235
    %v1438 = vpop.f32.mrb[0].mxu0
    %v1439 = vadd.f32 %v1169, %v1438
    %v1440 = vpop.f32.mrb[0].mxu0
    %1441 = vmatprep.mubr.f32.mxu0 0.0
    %1442 = vmatmul.mubr.f32.gmra.mrb[0].mxu0 %v1238
    %v1443 = vpop.f32.mrb[0].mxu0
    %v1444 = vadd.f32 %v1169, %v1443
    %v1445 = vpop.f32.mrb[0].mxu0
    %1446 = vmatprep.mubr.f32.mxu0 0.0
    %1447 = vmatmul.mubr.f32.gmra.mrb[0].mxu0 %v1241
    %v1448 = vpop.f32.mrb[0].mxu0
    %v1449 = vadd.f32 %v1169, %v1448
    %v1450 = vpop.f32.mrb[0].mxu0
    %1451 = vmatprep.mubr.f32.mxu0 0.0
    %1452 = vmatmul.mubr.f32.gmra.mrb[0].mxu0 %v1244
    %v1453 = vpop.f32.mrb[0].mxu0
    %v1454 = vadd.f32 %v1169, %v1453
    %v1455 = vpop.f32.mrb[0].mxu0
    %1456 = vmatprep.mubr.f32.mxu0 0.0
    %1457 = vmatmul.mubr.f32.gmra.mrb[0].mxu0 %v1247
    %v1458 = vpop.f32.mrb[0].mxu0
    %v1459 = vadd.f32 %v1169, %v1458
    %v1460 = vpop.f32.mrb[0].mxu0
    %1461 = vmatprep.mubr.f32.mxu0 0.0
    %1462 = vmatmul.mubr.f32.gmra.mrb[0].mxu0 %v1250
    %v1463 = vpop.f32.mrb[0].mxu0
    %v1464 = vadd.f32 %v1169, %v1463
    %v1465 = vpop.f32.mrb[0].mxu0
    %1466 = vmatprep.mubr.f32.mxu0 0.0
    %1467 = vmatmul.mubr.f32.gmra.mrb[0].mxu0 %v1253
    %v1468 = vpop.f32.mrb[0].mxu0
    %v1469 = vadd.f32 %v1169, %v1468
    %v1470 = vpop.f32.mrb[0].mxu0
    %1471 = vmatprep.mubr.f32.mxu0 0.0
    %1472 = vmatmul.mubr.f32.gmra.mrb[0].mxu0 %v1256
    %v1473 = vpop.f32.mrb[0].mxu0
    %v1474 = vadd.f32 %v1169, %v1473
    %v1475 = vpop.f32.mrb[0].mxu0
    %1476 = vmatprep.mubr.f32.mxu0 0.0
    %1477 = vmatmul.mubr.f32.gmra.mrb[0].mxu0 %v1259
    %v1478 = vpop.f32.mrb[0].mxu0
    %v1479 = vadd.f32 %v1169, %v1478
    %v1480 = vpop.f32.mrb[0].mxu0
    %1481 = vmatprep.mubr.f32.mxu0 0.0
    %1482 = vmatmul.mubr.f32.gmra.mrb[0].mxu0 %v1262
    %v1483 = vpop.f32.mrb[0].mxu0
    %v1484 = vadd.f32 %v1169, %v1483
    %v1485 = vpop.f32.mrb[0].mxu0
    %1486 = vmatprep.mubr.f32.mxu0 0.0
    %1487 = vmatmul.mubr.f32.gmra.mrb[0].mxu0 %v1265
    %v1488 = vpop.f32.mrb[0].mxu0
    %v1489 = vadd.f32 %v1169, %v1488
    %v1490 = vpop.f32.mrb[0].mxu0
    %1491 = vdwg.mxu0
    %v1492 = vmax.f32 %v1334, 0.0
    %v1493 = vmax.f32 %v1339, 0.0
    %v1494 = vmax.f32 %v1344, 0.0
    %v1495 = vmax.f32 %v1349, 0.0
    %v1496 = vmax.f32 %v1354, 0.0
    %v1497 = vmax.f32 %v1359, 0.0
    %v1498 = vmax.f32 %v1364, 0.0
    %v1499 = vmax.f32 %v1369, 0.0
    %v1500 = vmax.f32 %v1374, 0.0
    %v1501 = vmax.f32 %v1379, 0.0
    %v1502 = vmax.f32 %v1384, 0.0
    %v1503 = vmax.f32 %v1389, 0.0
    %v1504 = vmax.f32 %v1394, 0.0
    %v1505 = vmax.f32 %v1399, 0.0
    %v1506 = vmax.f32 %v1404, 0.0
    %v1507 = vmax.f32 %v1409, 0.0
    %v1508 = vmax.f32 %v1414, 0.0
    %v1509 = vmax.f32 %v1419, 0.0
    %v1510 = vmax.f32 %v1424, 0.0
    %v1511 = vmax.f32 %v1429, 0.0
    %v1512 = vmax.f32 %v1434, 0.0
    %v1513 = vmax.f32 %v1439, 0.0
    %v1514 = vmax.f32 %v1444, 0.0
    %v1515 = vmax.f32 %v1449, 0.0
    %v1516 = vmax.f32 %v1454, 0.0
    %v1517 = vmax.f32 %v1459, 0.0
    %v1518 = vmax.f32 %v1464, 0.0
    %v1519 = vmax.f32 %v1469, 0.0
    %v1520 = vmax.f32 %v1474, 0.0
    %v1521 = vmax.f32 %v1479, 0.0
    %v1522 = vmax.f32 %v1484, 0.0
    %v1523 = vmax.f32 %v1489, 0.0
    %v1524 = vld [vmem:[%s9] sm:$0xff]
    %v1525 = vld [vmem:[%s9 + $0x8] sm:$0xff]
    %v1526 = vld [vmem:[%s9 + $0x10] sm:$0xff]
    %v1527 = vld [vmem:[%s9 + $0x18] sm:$0xff]
    %v1529 = vsel %vm442, %v1492, 0
    %v1532 = vsel %vm442, %v1493, 0
    %v1535 = vsel %vm442, %v1494, 0
    %v1538 = vsel %vm442, %v1495, 0
    %v1541 = vsel %vm442, %v1496, 0
    %v1544 = vsel %vm442, %v1497, 0
    %v1547 = vsel %vm442, %v1498, 0
    %v1550 = vsel %vm442, %v1499, 0
    %v1553 = vsel %vm442, %v1500, 0
    %v1556 = vsel %vm442, %v1501, 0
    %v1559 = vsel %vm442, %v1502, 0
    %v1562 = vsel %vm442, %v1503, 0
    %v1565 = vsel %vm442, %v1504, 0
    %v1568 = vsel %vm442, %v1505, 0
    %v1571 = vsel %vm442, %v1506, 0
    %v1574 = vsel %vm442, %v1507, 0
    %v1577 = vsel %vm442, %v1508, 0
    %v1580 = vsel %vm442, %v1509, 0
    %v1583 = vsel %vm442, %v1510, 0
    %v1586 = vsel %vm442, %v1511, 0
    %v1589 = vsel %vm442, %v1512, 0
    %v1592 = vsel %vm442, %v1513, 0
    %v1595 = vsel %vm442, %v1514, 0
    %v1598 = vsel %vm442, %v1515, 0
    %v1601 = vsel %vm442, %v1516, 0
    %v1604 = vsel %vm442, %v1517, 0
    %v1607 = vsel %vm442, %v1518, 0
    %v1610 = vsel %vm442, %v1519, 0
    %v1613 = vsel %vm442, %v1520, 0
    %v1616 = vsel %vm442, %v1521, 0
    %v1619 = vsel %vm442, %v1522, 0
    %v1622 = vsel %vm442, %v1523, 0
    %1624 = vmatprep.subr.mxu0 0.0
    %1625 = vmatpush1.msra.mxu0 %v1524
    %1626 = vmatprep.subr.mxu0 0.0
    %1627 = vmatpush1.msra.mxu0 %v1525
    %1628 = vmatprep.subr.mxu0 0.0
    %1629 = vmatpush1.msra.mxu0 %v1526
    %1630 = vmatprep.subr.mxu0 0.0
    %1631 = vmatpush1.msra.mxu0 %v1527
    %1632 = vmatprep.subr.mxu0 0.0
    %1633 = vmatpush1.msra.mxu0 0.0
    %1634 = vmatprep.subr.mxu0 0.0
    %1635 = vmatpush1.msra.mxu0 0.0
    %1636 = vmatprep.subr.mxu0 0.0
    %1637 = vmatpush1.msra.mxu0 0.0
    %1638 = vmatprep.subr.mxu0 0.0
    %1639 = vmatpush1.msra.mxu0 0.0
    %1640 = vmatprep.subr.mxu0 0.0
    %1641 = vmatpush1.msra.mxu0 0.0
    %1642 = vmatprep.subr.mxu0 0.0
    %1643 = vmatpush1.msra.mxu0 0.0
    %1644 = vmatprep.subr.mxu0 0.0
    %1645 = vmatpush1.msra.mxu0 0.0
    %1646 = vmatprep.subr.mxu0 0.0
    %1647 = vmatpush1.msra.mxu0 0.0
    %1648 = vmatprep.subr.mxu0 0.0
    %1649 = vmatpush1.msra.mxu0 0.0
    %1650 = vmatprep.subr.mxu0 0.0
    %1651 = vmatpush1.msra.mxu0 0.0
    %1652 = vmatprep.subr.mxu0 0.0
    %1653 = vmatpush1.msra.mxu0 0.0
    %1654 = vmatprep.subr.mxu0 0.0
    %1655 = vmatpush1.msra.mxu0 0.0
    %1656 = vmatprep.subr.mxu0 0.0
    %1657 = vmatpush1.msra.mxu0 0.0
    %1658 = vmatprep.subr.mxu0 0.0
    %1659 = vmatpush1.msra.mxu0 0.0
    %1660 = vmatprep.subr.mxu0 0.0
    %1661 = vmatpush1.msra.mxu0 0.0
    %1662 = vmatprep.subr.mxu0 0.0
    %1663 = vmatpush1.msra.mxu0 0.0
    %1664 = vmatprep.subr.mxu0 0.0
    %1665 = vmatpush1.msra.mxu0 0.0
    %1666 = vmatprep.subr.mxu0 0.0
    %1667 = vmatpush1.msra.mxu0 0.0
    %1668 = vmatprep.subr.mxu0 0.0
    %1669 = vmatpush1.msra.mxu0 0.0
    %1670 = vmatprep.subr.mxu0 0.0
    %1671 = vmatpush1.msra.mxu0 0.0
    %1672 = vmatprep.subr.mxu0 0.0
    %1673 = vmatpush1.msra.mxu0 0.0
    %1674 = vmatprep.subr.mxu0 0.0
    %1675 = vmatpush1.msra.mxu0 0.0
    %1676 = vmatprep.subr.mxu0 0.0
    %1677 = vmatpush1.msra.mxu0 0.0
    %1678 = vmatprep.subr.mxu0 0.0
    %1679 = vmatpush1.msra.mxu0 0.0
    %1680 = vmatprep.subr.mxu0 0.0
    %1681 = vmatpush1.msra.mxu0 0.0
    %1682 = vmatprep.subr.mxu0 0.0
    %1683 = vmatpush1.msra.mxu0 0.0
    %1684 = vmatprep.subr.mxu0 0.0
    %1685 = vmatpush1.msra.mxu0 0.0
    %1686 = vmatprep.subr.mxu0 0.0
    %1687 = vmatpush1.msra.mxu0 0.0
    %1688 = vmatprep.mubr.f32.mxu0 0.0
    %1689 = vmatmul.mubr.f32.gmra.mrb[0].mxu0 %v1529
    %v1690 = vpop.f32.mrb[0].mxu0
    %v1691 = vadd.f32 0.0, %v1690
    %v1692 = vpop.f32.mrb[0].mxu0
    %1693 = vmatprep.mubr.f32.mxu0 0.0
    %1694 = vmatmul.mubr.f32.gmra.mrb[0].mxu0 %v1532
    %v1695 = vpop.f32.mrb[0].mxu0
    %v1696 = vadd.f32 0.0, %v1695
    %v1697 = vpop.f32.mrb[0].mxu0
    %1698 = vmatprep.mubr.f32.mxu0 0.0
    %1699 = vmatmul.mubr.f32.gmra.mrb[0].mxu0 %v1535
    %v1700 = vpop.f32.mrb[0].mxu0
    %v1701 = vadd.f32 0.0, %v1700
    %v1702 = vpop.f32.mrb[0].mxu0
    %1703 = vmatprep.mubr.f32.mxu0 0.0
    %1704 = vmatmul.mubr.f32.gmra.mrb[0].mxu0 %v1538
    %v1705 = vpop.f32.mrb[0].mxu0
    %v1706 = vadd.f32 0.0, %v1705
    %v1707 = vpop.f32.mrb[0].mxu0
    %1708 = vmatprep.mubr.f32.mxu0 0.0
    %1709 = vmatmul.mubr.f32.gmra.mrb[0].mxu0 %v1541
    %v1710 = vpop.f32.mrb[0].mxu0
    %v1711 = vadd.f32 0.0, %v1710
    %v1712 = vpop.f32.mrb[0].mxu0
    %1713 = vmatprep.mubr.f32.mxu0 0.0
    %1714 = vmatmul.mubr.f32.gmra.mrb[0].mxu0 %v1544
    %v1715 = vpop.f32.mrb[0].mxu0
    %v1716 = vadd.f32 0.0, %v1715
    %v1717 = vpop.f32.mrb[0].mxu0
    %1718 = vmatprep.mubr.f32.mxu0 0.0
    %1719 = vmatmul.mubr.f32.gmra.mrb[0].mxu0 %v1547
    %v1720 = vpop.f32.mrb[0].mxu0
    %v1721 = vadd.f32 0.0, %v1720
    %v1722 = vpop.f32.mrb[0].mxu0
    %1723 = vmatprep.mubr.f32.mxu0 0.0
    %1724 = vmatmul.mubr.f32.gmra.mrb[0].mxu0 %v1550
    %v1725 = vpop.f32.mrb[0].mxu0
    %v1726 = vadd.f32 0.0, %v1725
    %v1727 = vpop.f32.mrb[0].mxu0
    %1728 = vmatprep.mubr.f32.mxu0 0.0
    %1729 = vmatmul.mubr.f32.gmra.mrb[0].mxu0 %v1553
    %v1730 = vpop.f32.mrb[0].mxu0
    %v1731 = vadd.f32 0.0, %v1730
    %v1732 = vpop.f32.mrb[0].mxu0
    %1733 = vmatprep.mubr.f32.mxu0 0.0
    %1734 = vmatmul.mubr.f32.gmra.mrb[0].mxu0 %v1556
    %v1735 = vpop.f32.mrb[0].mxu0
    %v1736 = vadd.f32 0.0, %v1735
    %v1737 = vpop.f32.mrb[0].mxu0
    %1738 = vmatprep.mubr.f32.mxu0 0.0
    %1739 = vmatmul.mubr.f32.gmra.mrb[0].mxu0 %v1559
    %v1740 = vpop.f32.mrb[0].mxu0
    %v1741 = vadd.f32 0.0, %v1740
    %v1742 = vpop.f32.mrb[0].mxu0
    %1743 = vmatprep.mubr.f32.mxu0 0.0
    %1744 = vmatmul.mubr.f32.gmra.mrb[0].mxu0 %v1562
    %v1745 = vpop.f32.mrb[0].mxu0
    %v1746 = vadd.f32 0.0, %v1745
    %v1747 = vpop.f32.mrb[0].mxu0
    %1748 = vmatprep.mubr.f32.mxu0 0.0
    %1749 = vmatmul.mubr.f32.gmra.mrb[0].mxu0 %v1565
    %v1750 = vpop.f32.mrb[0].mxu0
    %v1751 = vadd.f32 0.0, %v1750
    %v1752 = vpop.f32.mrb[0].mxu0
    %1753 = vmatprep.mubr.f32.mxu0 0.0
    %1754 = vmatmul.mubr.f32.gmra.mrb[0].mxu0 %v1568
    %v1755 = vpop.f32.mrb[0].mxu0
    %v1756 = vadd.f32 0.0, %v1755
    %v1757 = vpop.f32.mrb[0].mxu0
    %1758 = vmatprep.mubr.f32.mxu0 0.0
    %1759 = vmatmul.mubr.f32.gmra.mrb[0].mxu0 %v1571
    %v1760 = vpop.f32.mrb[0].mxu0
    %v1761 = vadd.f32 0.0, %v1760
    %v1762 = vpop.f32.mrb[0].mxu0
    %1763 = vmatprep.mubr.f32.mxu0 0.0
    %1764 = vmatmul.mubr.f32.gmra.mrb[0].mxu0 %v1574
    %v1765 = vpop.f32.mrb[0].mxu0
    %v1766 = vadd.f32 0.0, %v1765
    %v1767 = vpop.f32.mrb[0].mxu0
    %1768 = vmatprep.mubr.f32.mxu0 0.0
    %1769 = vmatmul.mubr.f32.gmra.mrb[0].mxu0 %v1577
    %v1770 = vpop.f32.mrb[0].mxu0
    %v1771 = vadd.f32 0.0, %v1770
    %v1772 = vpop.f32.mrb[0].mxu0
    %1773 = vmatprep.mubr.f32.mxu0 0.0
    %1774 = vmatmul.mubr.f32.gmra.mrb[0].mxu0 %v1580
    %v1775 = vpop.f32.mrb[0].mxu0
    %v1776 = vadd.f32 0.0, %v1775
    %v1777 = vpop.f32.mrb[0].mxu0
    %1778 = vmatprep.mubr.f32.mxu0 0.0
    %1779 = vmatmul.mubr.f32.gmra.mrb[0].mxu0 %v1583
    %v1780 = vpop.f32.mrb[0].mxu0
    %v1781 = vadd.f32 0.0, %v1780
    %v1782 = vpop.f32.mrb[0].mxu0
    %1783 = vmatprep.mubr.f32.mxu0 0.0
    %1784 = vmatmul.mubr.f32.gmra.mrb[0].mxu0 %v1586
    %v1785 = vpop.f32.mrb[0].mxu0
    %v1786 = vadd.f32 0.0, %v1785
    %v1787 = vpop.f32.mrb[0].mxu0
    %1788 = vmatprep.mubr.f32.mxu0 0.0
    %1789 = vmatmul.mubr.f32.gmra.mrb[0].mxu0 %v1589
    %v1790 = vpop.f32.mrb[0].mxu0
    %v1791 = vadd.f32 0.0, %v1790
    %v1792 = vpop.f32.mrb[0].mxu0
    %1793 = vmatprep.mubr.f32.mxu0 0.0
    %1794 = vmatmul.mubr.f32.gmra.mrb[0].mxu0 %v1592
    %v1795 = vpop.f32.mrb[0].mxu0
    %v1796 = vadd.f32 0.0, %v1795
    %v1797 = vpop.f32.mrb[0].mxu0
    %1798 = vmatprep.mubr.f32.mxu0 0.0
    %1799 = vmatmul.mubr.f32.gmra.mrb[0].mxu0 %v1595
    %v1800 = vpop.f32.mrb[0].mxu0
    %v1801 = vadd.f32 0.0, %v1800
    %v1802 = vpop.f32.mrb[0].mxu0
    %1803 = vmatprep.mubr.f32.mxu0 0.0
    %1804 = vmatmul.mubr.f32.gmra.mrb[0].mxu0 %v1598
    %v1805 = vpop.f32.mrb[0].mxu0
    %v1806 = vadd.f32 0.0, %v1805
    %v1807 = vpop.f32.mrb[0].mxu0
    %1808 = vmatprep.mubr.f32.mxu0 0.0
    %1809 = vmatmul.mubr.f32.gmra.mrb[0].mxu0 %v1601
    %v1810 = vpop.f32.mrb[0].mxu0
    %v1811 = vadd.f32 0.0, %v1810
    %v1812 = vpop.f32.mrb[0].mxu0
    %1813 = vmatprep.mubr.f32.mxu0 0.0
    %1814 = vmatmul.mubr.f32.gmra.mrb[0].mxu0 %v1604
    %v1815 = vpop.f32.mrb[0].mxu0
    %v1816 = vadd.f32 0.0, %v1815
    %v1817 = vpop.f32.mrb[0].mxu0
    %1818 = vmatprep.mubr.f32.mxu0 0.0
    %1819 = vmatmul.mubr.f32.gmra.mrb[0].mxu0 %v1607
    %v1820 = vpop.f32.mrb[0].mxu0
    %v1821 = vadd.f32 0.0, %v1820
    %v1822 = vpop.f32.mrb[0].mxu0
    %1823 = vmatprep.mubr.f32.mxu0 0.0
    %1824 = vmatmul.mubr.f32.gmra.mrb[0].mxu0 %v1610
    %v1825 = vpop.f32.mrb[0].mxu0
    %v1826 = vadd.f32 0.0, %v1825
    %v1827 = vpop.f32.mrb[0].mxu0
    %1828 = vmatprep.mubr.f32.mxu0 0.0
    %1829 = vmatmul.mubr.f32.gmra.mrb[0].mxu0 %v1613
    %v1830 = vpop.f32.mrb[0].mxu0
    %v1831 = vadd.f32 0.0, %v1830
    %v1832 = vpop.f32.mrb[0].mxu0
    %1833 = vmatprep.mubr.f32.mxu0 0.0
    %1834 = vmatmul.mubr.f32.gmra.mrb[0].mxu0 %v1616
    %v1835 = vpop.f32.mrb[0].mxu0
    %v1836 = vadd.f32 0.0, %v1835
    %v1837 = vpop.f32.mrb[0].mxu0
    %1838 = vmatprep.mubr.f32.mxu0 0.0
    %1839 = vmatmul.mubr.f32.gmra.mrb[0].mxu0 %v1619
    %v1840 = vpop.f32.mrb[0].mxu0
    %v1841 = vadd.f32 0.0, %v1840
    %v1842 = vpop.f32.mrb[0].mxu0
    %1843 = vmatprep.mubr.f32.mxu0 0.0
    %1844 = vmatmul.mubr.f32.gmra.mrb[0].mxu0 %v1622
    %v1845 = vpop.f32.mrb[0].mxu0
    %v1846 = vadd.f32 0.0, %v1845
    %v1847 = vpop.f32.mrb[0].mxu0
    %1848 = vdwg.mxu0
    %1849 = vst [vmem:[#allocation2] sm:$0xff] %v1691
    %1850 = vst [vmem:[#allocation2 + $0x8] sm:$0xff] %v1696
    %1851 = vst [vmem:[#allocation2 + $0x10] sm:$0xff] %v1701
    %1852 = vst [vmem:[#allocation2 + $0x18] sm:$0xff] %v1706
    %1853 = vst [vmem:[#allocation2 + $0x20] sm:$0xff] %v1711
    %1854 = vst [vmem:[#allocation2 + $0x28] sm:$0xff] %v1716
    %1855 = vst [vmem:[#allocation2 + $0x30] sm:$0xff] %v1721
    %1856 = vst [vmem:[#allocation2 + $0x38] sm:$0xff] %v1726
    %1857 = vst [vmem:[#allocation2 + $0x40] sm:$0xff] %v1731
    %1858 = vst [vmem:[#allocation2 + $0x48] sm:$0xff] %v1736
    %1859 = vst [vmem:[#allocation2 + $0x50] sm:$0xff] %v1741
    %1860 = vst [vmem:[#allocation2 + $0x58] sm:$0xff] %v1746
    %1861 = vst [vmem:[#allocation2 + $0x60] sm:$0xff] %v1751
    %1862 = vst [vmem:[#allocation2 + $0x68] sm:$0xff] %v1756
    %1863 = vst [vmem:[#allocation2 + $0x70] sm:$0xff] %v1761
    %1864 = vst [vmem:[#allocation2 + $0x78] sm:$0xff] %v1766
    %1865 = vst [vmem:[#allocation2 + $0x80] sm:$0xff] %v1771
    %1866 = vst [vmem:[#allocation2 + $0x88] sm:$0xff] %v1776
    %1867 = vst [vmem:[#allocation2 + $0x90] sm:$0xff] %v1781
    %1868 = vst [vmem:[#allocation2 + $0x98] sm:$0xff] %v1786
    %1869 = vst [vmem:[#allocation2 + $0xa0] sm:$0xff] %v1791
    %1870 = vst [vmem:[#allocation2 + $0xa8] sm:$0xff] %v1796
    %1871 = vst [vmem:[#allocation2 + $0xb0] sm:$0xff] %v1801
    %1872 = vst [vmem:[#allocation2 + $0xb8] sm:$0xff] %v1806
    %1873 = vst [vmem:[#allocation2 + $0xc0] sm:$0xff] %v1811
    %1874 = vst [vmem:[#allocation2 + $0xc8] sm:$0xff] %v1816
    %1875 = vst [vmem:[#allocation2 + $0xd0] sm:$0xff] %v1821
    %1876 = vst [vmem:[#allocation2 + $0xd8] sm:$0xff] %v1826
    %1877 = vst [vmem:[#allocation2 + $0xe0] sm:$0xff] %v1831
    %1878 = vst [vmem:[#allocation2 + $0xe8] sm:$0xff] %v1836
    %1879 = vst [vmem:[#allocation2 + $0xf0] sm:$0xff] %v1841
    %1880 = vst [vmem:[#allocation2 + $0xf8] sm:$0xff] %v1846
    // Predicated region
    $region42: #{tpu_custom_call.1} parent=1 // pred_check
      _
    $region43: #{tpu_custom_call.1} parent=1 // pred_check_branch
      %1882 = sbr.rel (0) target = $region45
    $region44: #{tpu_custom_call.1} parent=1 // pred_region
      %s1884 = ssub.s32 4096, 4096
      %1885 = vsyncadd [#allocation3], %s1884
      %s1886 = sshll.u32 [#allocation2], 4
      %s1887 = int_to_ptr.vmem [resolvable:$true] %s1886
      %1892 = dma.vmem_to_hbm [thread:$0]  %s1887, 4096, %s10, [#allocation3], 128, 128, 8
    $region45: #{tpu_custom_call.1} parent=1 // pred_fallthru
      _
    // Predicated region
    $region46: #{tpu_custom_call.1} parent=1 // pred_check
      _
    $region47: #{tpu_custom_call.1} parent=1 // pred_check_branch
      %1894 = sbr.rel (0) target = $region49
    $region48: #{tpu_custom_call.1} parent=1 // pred_region
      %1895 = dma.done [#allocation3], 4096
    $region49: #{tpu_custom_call.1} parent=1 // pred_fallthru
      _
    %1896 = vsyncpa [#allocation3], 1

</llo_original>
